<compile_context>
chip_gen: v7x
topology: tpu7x:2x2x1
jax: 0.10.0
libtpu: 0.0.40
codegen_flags: <defaults>
</compile_context>

<pallas_src>
import jax
import jax.numpy as jnp
from jax.experimental import pallas as pl
from jax.experimental.pallas import tpu as pltpu


_TINY_PIXELS = 4096                 # below this, fused XLA beats a kernel launch
_VMEM_PER_BUFFER = 3 * 1024 * 1024  # ~3 MiB per block buffer (x4 buffers ~12 MiB)


def _round_up(x: int, m: int) -> int:
    return ((x + m - 1) // m) * m


def _hsv_channels(h, s, v):
    """Shared HSV->RGB math (used by the kernel and the fused XLA fallback).

    Matches torch: hi = floor(h*6) % 6 ; f = (h*6) % 6 - hi, via the identity
    floor(x) % 6 == floor(x % 6) and x % 6 == x - floor(x/6)*6.
    """
    h6 = h * jnp.float32(6.0)
    hm = h6 - jnp.floor(h6 * jnp.float32(1.0 / 6.0)) * jnp.float32(6.0)
    fl = jnp.floor(hm)              # sector id, exact small integer in f32
    f = hm - fl

    one = jnp.float32(1.0)
    p = v * (one - s)
    q = v * (one - f * s)
    t = v * (one - (one - f) * s)

    # Sector masks computed once, shared by all three channels (f32 compares;
    # fl is an exact integer so equality is exact).  Sector 5 is fall-through.
    m0 = fl == 0.0
    m1 = fl == 1.0
    m2 = fl == 2.0
    m3 = fl == 3.0
    m4 = fl == 4.0

    # R table: [v, q, p, p, t, v]
    r = jnp.where(m0, v, jnp.where(m1, q, jnp.where(m2 | m3, p,
                                                    jnp.where(m4, t, v))))
    # G table: [t, v, v, q, p, p]
    g = jnp.where(m0, t, jnp.where(m1 | m2, v, jnp.where(m3, q, p)))
    # B table: [p, p, t, v, v, q]
    b = jnp.where(m0 | m1, p, jnp.where(m2, t, jnp.where(m3 | m4, v, q)))
    return r, g, b


def _hsv_to_rgb_kernel(x_ref, o_ref):
    """x_ref/o_ref: (3, th, W) float32 blocks. Channel 0=H, 1=S, 2=V."""
    r, g, b = _hsv_channels(x_ref[0], x_ref[1], x_ref[2])
    o_ref[0] = r
    o_ref[1] = g
    o_ref[2] = b


def _choose_tile_rows(H: int, W: int) -> int:
    """Pick a row-tile height: ~3 MiB per buffer, >= ~4 grid steps, 8-aligned."""
    bytes_per_row = 3 * W * 4
    th_budget = max(8, (_VMEM_PER_BUFFER // max(bytes_per_row, 1)) // 8 * 8)
    # Keep >= ~4 grid steps so v7x megacore ("parallel") has work to split.
    th_split = max(8, _round_up(-(-H // 4), 8))
    th = min(th_budget, th_split)
    if th >= H:
        return H  # single full-height block (block dim == array dim is legal)
    return th     # multiple of 8; last block may be partial (masked stores)


def hsv_to_rgb_pallas(pixels: jax.Array) -> jax.Array:
    """pixels: (3, H, W) float32 HSV in [0, 1]. Returns (3, H, W) RGB f32."""
    assert pixels.ndim == 3 and pixels.shape[0] == 3, pixels.shape
    _, H, W = pixels.shape
    x = pixels.astype(jnp.float32)

    th = _choose_tile_rows(H, W)
    grid = (pl.cdiv(H, th),)

    return pl.pallas_call(
        _hsv_to_rgb_kernel,
        out_shape=jax.ShapeDtypeStruct((3, H, W), jnp.float32),
        grid_spec=pltpu.PrefetchScalarGridSpec(
            num_scalar_prefetch=0,
            grid=grid,
            in_specs=[pl.BlockSpec((3, th, W), lambda i: (0, i, 0))],
            out_specs=pl.BlockSpec((3, th, W), lambda i: (0, i, 0)),
        ),
        compiler_params=pltpu.CompilerParams(
            dimension_semantics=("parallel",),   # megacore row split on v7x
        ),
    )(x)


def _hsv_to_rgb_fused(image: jax.Array) -> jax.Array:
    """Fused XLA elementwise path for tiny images (same math as the kernel)."""
    h = image[..., 0, :, :].astype(jnp.float32)
    s = image[..., 1, :, :].astype(jnp.float32)
    v = image[..., 2, :, :].astype(jnp.float32)
    r, g, b = _hsv_channels(h, s, v)
    return jnp.stack([r, g, b], axis=-3)


def _hsv_to_rgb_torch_ref(image: jax.Array) -> jax.Array:
    """Faithful port of the torch reference (mod/floor + table gather); test-only."""
    h = image[..., 0, :, :]
    s = image[..., 1, :, :]
    v = image[..., 2, :, :]
    hi = jnp.mod(jnp.floor(h * 6.0), 6.0)
    f = jnp.mod(h * 6.0, 6.0) - hi
    p = v * (1.0 - s)
    q = v * (1.0 - f * s)
    t = v * (1.0 - (1.0 - f) * s)
    hi_i = hi.astype(jnp.int32)
    r_tab = jnp.stack([v, q, p, p, t, v], axis=0)
    g_tab = jnp.stack([t, v, v, q, p, p], axis=0)
    b_tab = jnp.stack([p, p, t, v, v, q], axis=0)
    r = jnp.take_along_axis(r_tab, hi_i[None], axis=0)[0]
    g = jnp.take_along_axis(g_tab, hi_i[None], axis=0)[0]
    b = jnp.take_along_axis(b_tab, hi_i[None], axis=0)[0]
    return jnp.stack([r, g, b], axis=-3)


def hsv_to_rgb(pixels: jax.Array) -> jax.Array:
    """Dispatch: Pallas kernel for real images, fused XLA for tiny/batched ones."""
    if (
        pixels.ndim != 3
        or pixels.shape[0] != 3
        or pixels.shape[-2] * pixels.shape[-1] < _TINY_PIXELS
    ):
        return _hsv_to_rgb_fused(pixels)
    return hsv_to_rgb_pallas(pixels)


class PixelsHSV:
    """JAX/Pallas port of the PyTorch PixelsHSV module (hsv=True path)."""

    def __init__(self, resolution, key):
        # torch: Parameter(torch.rand((3, resolution[1], resolution[0])) * 0.05 + 0.475)
        w, h = resolution[0], resolution[1]
        self.resolution = resolution
        self.pixels = (
            jax.random.uniform(key, (3, h, w), dtype=jnp.float32) * 0.05 + 0.475
        )
        # set outside __init__ in the original code base; this is the HSV variant
        self.hsv = True

    def forward(self):
        pixels = self.pixels
        if self.hsv:
            pixels = hsv_to_rgb(pixels)
        return pixels

    def info_str(self) -> str:
        return (
            f"mean hsv {float(self.pixels[0].mean()):.3f}, "
            f"{float(self.pixels[1].mean()):.3f}, "
            f"{float(self.pixels[2].mean()):.3f}, "
        )


if __name__ == "__main__":
    key = jax.random.PRNGKey(0)
    k0, k1, k2 = jax.random.split(key, 3)

    # 1) Tiny module shape: dispatches to the fused-XLA where-chain path.
    m_small = PixelsHSV((16, 16), k0)
    out_small = jax.block_until_ready(m_small.forward())
    ref_small = _hsv_to_rgb_torch_ref(m_small.pixels)
    assert out_small.shape == (3, 16, 16), out_small.shape
    assert jnp.allclose(out_small, ref_small, atol=1e-6, rtol=1e-6)

    # 2) Pallas path: resolution=(W=512, H=384) -> pixels (3, 384, 512),
    #    zero-copy row tiling, grid=4 (megacore-parallel on v7x).
    m_big = PixelsHSV((512, 384), k1)
    out_big = jax.block_until_ready(m_big.forward())
    ref_big = _hsv_to_rgb_torch_ref(m_big.pixels)
    assert out_big.shape == (3, 384, 512), out_big.shape
    assert out_big.dtype == jnp.float32
    assert jnp.allclose(out_big, ref_big, atol=1e-6, rtol=1e-6), float(
        jnp.max(jnp.abs(out_big - ref_big))
    )

    # 3) Pallas path on a ragged shape: H=100 (partial last row block) and
    #    W=200 (non-128-multiple lane width); hits all 6 hue sectors.
    pix = jax.random.uniform(k2, (3, 100, 200), dtype=jnp.float32)
    out_r = jax.block_until_ready(hsv_to_rgb_pallas(pix))
    ref_r = _hsv_to_rgb_torch_ref(pix)
    assert out_r.shape == pix.shape
    assert jnp.allclose(out_r, ref_r, atol=1e-6, rtol=1e-6), float(
        jnp.max(jnp.abs(out_r - ref_r))
    )

    # 4) Hue edge cases (h = 0.0, exactly 1.0, sector boundaries) through the
    #    Pallas kernel itself.
    h_edge = jnp.linspace(0.0, 1.0, 16 * 256, dtype=jnp.float32).reshape(16, 256)
    s_edge = jnp.full((16, 256), 0.7, dtype=jnp.float32)
    v_edge = jnp.full((16, 256), 0.9, dtype=jnp.float32)
    pix_edge = jnp.stack([h_edge, s_edge, v_edge], axis=0)
    out_e = jax.block_until_ready(hsv_to_rgb_pallas(pix_edge))
    ref_e = _hsv_to_rgb_torch_ref(pix_edge)
    assert jnp.allclose(out_e, ref_e, atol=1e-6, rtol=1e-6), float(
        jnp.max(jnp.abs(out_e - ref_e))
    )

    print("KERNEL_OK")
</pallas_src>

<mosaic_0001>
module attributes {stable_mosaic.version = 11 : i64} {
  func.func @_hsv_to_rgb_kernel(%arg0: i32, %arg1: memref<3x96x512xf32, #tpu.memory_space<vmem>>, %arg2: memref<3x96x512xf32, #tpu.memory_space<vmem>>) attributes {dimension_semantics = [#tpu.dimension_semantics<parallel>], iteration_bounds = array<i64: 4>, scalar_prefetch = 0 : i64, scratch_operands = 0 : i64, tpu.core_type = #tpu.core_type<tc>, window_params = [{transform_indices = @transform_0, window_bounds = array<i64: 3, 96, 512>}, {transform_indices = @transform_1, window_bounds = array<i64: 3, 96, 512>}]} {
    %c0 = arith.constant 0 : index
    %c0_0 = arith.constant 0 : index
    %c0_1 = arith.constant 0 : index
    %0 = vector.load %arg1[%c0, %c0_0, %c0_1] : memref<3x96x512xf32, #tpu.memory_space<vmem>>, vector<1x96x512xf32>
    %1 = vector.shape_cast %0 : vector<1x96x512xf32> to vector<96x512xf32>
    %c1 = arith.constant 1 : index
    %c0_2 = arith.constant 0 : index
    %c0_3 = arith.constant 0 : index
    %2 = vector.load %arg1[%c1, %c0_2, %c0_3] : memref<3x96x512xf32, #tpu.memory_space<vmem>>, vector<1x96x512xf32>
    %3 = vector.shape_cast %2 : vector<1x96x512xf32> to vector<96x512xf32>
    %c2 = arith.constant 2 : index
    %c0_4 = arith.constant 0 : index
    %c0_5 = arith.constant 0 : index
    %4 = vector.load %arg1[%c2, %c0_4, %c0_5] : memref<3x96x512xf32, #tpu.memory_space<vmem>>, vector<1x96x512xf32>
    %5 = vector.shape_cast %4 : vector<1x96x512xf32> to vector<96x512xf32>
    %cst = arith.constant 6.000000e+00 : f32
    %6 = vector.broadcast %cst : f32 to vector<96x512xf32>
    %7 = arith.mulf %1, %6 : vector<96x512xf32>
    %cst_6 = arith.constant 0.166666672 : f32
    %8 = vector.broadcast %cst_6 : f32 to vector<96x512xf32>
    %9 = arith.mulf %7, %8 : vector<96x512xf32>
    %10 = math.floor %9 : vector<96x512xf32>
    %cst_7 = arith.constant 6.000000e+00 : f32
    %11 = vector.broadcast %cst_7 : f32 to vector<96x512xf32>
    %12 = arith.mulf %10, %11 : vector<96x512xf32>
    %13 = arith.subf %7, %12 : vector<96x512xf32>
    %14 = math.floor %13 : vector<96x512xf32>
    %15 = arith.subf %13, %14 : vector<96x512xf32>
    %cst_8 = arith.constant 1.000000e+00 : f32
    %16 = vector.broadcast %cst_8 : f32 to vector<96x512xf32>
    %17 = arith.subf %16, %3 : vector<96x512xf32>
    %18 = arith.mulf %5, %17 : vector<96x512xf32>
    %19 = arith.mulf %15, %3 : vector<96x512xf32>
    %cst_9 = arith.constant 1.000000e+00 : f32
    %20 = vector.broadcast %cst_9 : f32 to vector<96x512xf32>
    %21 = arith.subf %20, %19 : vector<96x512xf32>
    %22 = arith.mulf %5, %21 : vector<96x512xf32>
    %cst_10 = arith.constant 1.000000e+00 : f32
    %23 = vector.broadcast %cst_10 : f32 to vector<96x512xf32>
    %24 = arith.subf %23, %15 : vector<96x512xf32>
    %25 = arith.mulf %24, %3 : vector<96x512xf32>
    %cst_11 = arith.constant 1.000000e+00 : f32
    %26 = vector.broadcast %cst_11 : f32 to vector<96x512xf32>
    %27 = arith.subf %26, %25 : vector<96x512xf32>
    %28 = arith.mulf %5, %27 : vector<96x512xf32>
    %cst_12 = arith.constant 0.000000e+00 : f32
    %29 = vector.broadcast %cst_12 : f32 to vector<96x512xf32>
    %30 = arith.cmpf oeq, %14, %29 : vector<96x512xf32>
    %cst_13 = arith.constant 1.000000e+00 : f32
    %31 = vector.broadcast %cst_13 : f32 to vector<96x512xf32>
    %32 = arith.cmpf oeq, %14, %31 : vector<96x512xf32>
    %cst_14 = arith.constant 2.000000e+00 : f32
    %33 = vector.broadcast %cst_14 : f32 to vector<96x512xf32>
    %34 = arith.cmpf oeq, %14, %33 : vector<96x512xf32>
    %cst_15 = arith.constant 3.000000e+00 : f32
    %35 = vector.broadcast %cst_15 : f32 to vector<96x512xf32>
    %36 = arith.cmpf oeq, %14, %35 : vector<96x512xf32>
    %cst_16 = arith.constant 4.000000e+00 : f32
    %37 = vector.broadcast %cst_16 : f32 to vector<96x512xf32>
    %38 = arith.cmpf oeq, %14, %37 : vector<96x512xf32>
    %39 = arith.ori %34, %36 : vector<96x512xi1>
    %40 = arith.select %38, %28, %5 : vector<96x512xi1>, vector<96x512xf32>
    %41 = arith.select %39, %18, %40 : vector<96x512xi1>, vector<96x512xf32>
    %42 = arith.select %32, %22, %41 : vector<96x512xi1>, vector<96x512xf32>
    %43 = arith.select %30, %5, %42 : vector<96x512xi1>, vector<96x512xf32>
    %44 = arith.ori %32, %34 : vector<96x512xi1>
    %45 = arith.select %36, %22, %18 : vector<96x512xi1>, vector<96x512xf32>
    %46 = arith.select %44, %5, %45 : vector<96x512xi1>, vector<96x512xf32>
    %47 = arith.select %30, %28, %46 : vector<96x512xi1>, vector<96x512xf32>
    %48 = arith.ori %30, %32 : vector<96x512xi1>
    %49 = arith.ori %36, %38 : vector<96x512xi1>
    %50 = arith.select %49, %5, %22 : vector<96x512xi1>, vector<96x512xf32>
    %51 = arith.select %34, %28, %50 : vector<96x512xi1>, vector<96x512xf32>
    %52 = arith.select %48, %18, %51 : vector<96x512xi1>, vector<96x512xf32>
    %c0_17 = arith.constant 0 : index
    %c0_18 = arith.constant 0 : index
    %c0_19 = arith.constant 0 : index
    %53 = vector.load %arg2[%c0_17, %c0_18, %c0_19] : memref<3x96x512xf32, #tpu.memory_space<vmem>>, vector<1x96x512xf32>
    %54 = vector.shape_cast %53 : vector<1x96x512xf32> to vector<96x512xf32>
    %55 = vector.shape_cast %43 : vector<96x512xf32> to vector<1x96x512xf32>
    tpu.vector_store %arg2[%c0_17, %c0_18, %c0_19], %55 {strides = array<i32>} : memref<3x96x512xf32, #tpu.memory_space<vmem>>, vector<1x96x512xf32>,
    %c1_20 = arith.constant 1 : index
    %c0_21 = arith.constant 0 : index
    %c0_22 = arith.constant 0 : index
    %56 = vector.load %arg2[%c1_20, %c0_21, %c0_22] : memref<3x96x512xf32, #tpu.memory_space<vmem>>, vector<1x96x512xf32>
    %57 = vector.shape_cast %56 : vector<1x96x512xf32> to vector<96x512xf32>
    %58 = vector.shape_cast %47 : vector<96x512xf32> to vector<1x96x512xf32>
    tpu.vector_store %arg2[%c1_20, %c0_21, %c0_22], %58 {strides = array<i32>} : memref<3x96x512xf32, #tpu.memory_space<vmem>>, vector<1x96x512xf32>,
    %c2_23 = arith.constant 2 : index
    %c0_24 = arith.constant 0 : index
    %c0_25 = arith.constant 0 : index
    %59 = vector.load %arg2[%c2_23, %c0_24, %c0_25] : memref<3x96x512xf32, #tpu.memory_space<vmem>>, vector<1x96x512xf32>
    %60 = vector.shape_cast %59 : vector<1x96x512xf32> to vector<96x512xf32>
    %61 = vector.shape_cast %52 : vector<96x512xf32> to vector<1x96x512xf32>
    tpu.vector_store %arg2[%c2_23, %c0_24, %c0_25], %61 {strides = array<i32>} : memref<3x96x512xf32, #tpu.memory_space<vmem>>, vector<1x96x512xf32>,
    return
  }
  func.func @transform_0(%arg0: i32) -> (i32, i32, i32) {
    %c0_i32 = arith.constant 0 : i32
    %c0_i32_0 = arith.constant 0 : i32
    %c0_i32_1 = arith.constant 0 : i32
    return %c0_i32, %arg0, %c0_i32_0 : i32, i32, i32
  }
  func.func @transform_1(%arg0: i32) -> (i32, i32, i32) {
    %c0_i32 = arith.constant 0 : i32
    %c0_i32_0 = arith.constant 0 : i32
    %c0_i32_1 = arith.constant 0 : i32
    return %c0_i32, %arg0, %c0_i32_0 : i32, i32, i32
  }
}

</mosaic_0001>

<llo_original>
// kernel: tpu_custom_call.1
$region0: #{tpu_custom_call.1}
  #allocation0 [shape = 'u32[]', space=smem, size = 0x4, offset = 0x4, fixed_abs, tag = 'smem constant byte address 0x4 - core index']
  #allocation1 [shape = 'u32[144,128]{1,0:T(1,128)}', space=vmem, size = 0x12000, scoped, tag = 'internal scratch']
  #allocation6 [shape = 's32[]', space=sflag, size = 0x4, offset = 0, fixed_abs, tag = 'sflag constant byte address 0x0 - dummy sync flag']
  #allocation8 [shape = 's32[]', space=sflag, size = 0x4, offset = 0, fixed_abs, tag = 'sflag constant byte address 0x0 - dummy sync flag']
  %s0 = inlined_call_operand.hbm [shape: f32[3,384,512], index: 0, kind: input, shape index: {}]
  %s1 = inlined_call_operand.hbm [shape: f32[3,384,512], index: 1, kind: output, shape index: {}]
  %s2 = sld [smem:[#allocation0]]
  $region41: #{tpu_custom_call.1} parent=0
    _
  %s4 = ssub.s32 1, %s2
  %s5 = scalar_select 0, %s4, %s2
  $region1: #{tpu_custom_call.1} parent=0
    #allocation2 [shape = 'u8[1179648]{0}', space=vmem, size = 0x120000, scoped, tag = 'input window, operand 0']
    #allocation3 [shape = 's32[2]{0}', space=sflag, size = 0x8, scoped, tag = 'scoped memory for tpu_custom_call.1']
    #allocation4 [shape = 's32[2]{0}', space=sflag, size = 0x8, scoped, tag = 'scoped memory for tpu_custom_call.1']
    #allocation5 [shape = 'u8[1179648]{0}', space=vmem, size = 0x120000, scoped, tag = 'output window, operand 0']
    %6 = vsyncpa [#allocation3], 0
    %s7 = scalar_lea.sflag [#allocation3], 1
    %8 = vsyncpa %s7, 0
    %9 = vsyncpa [#allocation4], 0
    %s10 = scalar_lea.sflag [#allocation4], 1
    %11 = vsyncpa %s10, 0
    loop: start=0, step=1, limit=6
    $region2: #{tpu_custom_call.1} parent=1 // loop_pre_header
      _
    $region3: #{tpu_custom_call.1} parent=1 // loop_header
      %s13 = sphi 0, %s17
      %p14 = scmp.ge.s32.totalorder %s13, 6
      %s23 = sphi 0, %s25
      %s26 = sphi 0, %s23
      %s27 = sphi 0, %s26
      %s43 = sphi 0, %s27
      %s49 = sphi 0, %s51
      %s52 = sphi 0, %s49
      %s53 = sphi 0, %s52
      %s69 = sphi 0, %s53
    $region4: #{tpu_custom_call.1} parent=1 // loop_header_branch
      %16 = sbr.rel (%p14) target = $region8
    $region5: #{tpu_custom_call.1} parent=1 // loop_body
      %s18 = ssub.s32 %s13, 1
      %s19 = ssub.s32 %s13, 2
      %s20 = sadd.s32 %s13, 1
      %s21 = ssub.s32 %s13, %s20
      %p22 = scmp.eq.s32.totalorder %s21, 0
      %s24 = sadd.s32 %s23, 1
      %s25 = scalar_select %p22, %s23, %s24
      %p28 = pneg %p22
      %p29 = scmp.eq.s32.totalorder %s13, 3
      %p30 = por %p28, %p29
      %p31 = scmp.ne.s32.totalorder %s23, %s26
      %p32 = scmp.eq.s32.totalorder %s13, 0
      %p33 = por %p31, %p32
      %p34 = scmp.ne.s32.totalorder %s23, %s26
      %p35 = scmp.eq.s32.totalorder %s18, 3
      %p36 = por %p34, %p35
      %p37 = scmp.ne.s32.totalorder %s26, %s27
      %p38 = scmp.eq.s32.totalorder %s18, 0
      %p39 = por %p37, %p38
      %p40 = scmp.ne.s32.totalorder %s26, %s27
      %p41 = scmp.eq.s32.totalorder %s19, 3
      %p42 = por %p40, %p41
      %p44 = scmp.ne.s32.totalorder %s27, %s43
      %p45 = scmp.eq.s32.totalorder %s19, 0
      %p46 = por %p44, %p45
      %s47 = ssub.s32 %s13, %s20
      %p48 = scmp.eq.s32.totalorder %s47, 0
      %s50 = sadd.s32 %s49, 1
      %s51 = scalar_select %p48, %s49, %s50
      %p54 = pneg %p48
      %p55 = scmp.eq.s32.totalorder %s13, 3
      %p56 = por %p54, %p55
      %p57 = scmp.ne.s32.totalorder %s49, %s52
      %p58 = scmp.eq.s32.totalorder %s13, 0
      %p59 = por %p57, %p58
      %p60 = scmp.ne.s32.totalorder %s49, %s52
      %p61 = scmp.eq.s32.totalorder %s18, 3
      %p62 = por %p60, %p61
      %p63 = scmp.ne.s32.totalorder %s52, %s53
      %p64 = scmp.eq.s32.totalorder %s18, 0
      %p65 = por %p63, %p64
      %p66 = scmp.ne.s32.totalorder %s52, %s53
      %p67 = scmp.eq.s32.totalorder %s19, 3
      %p68 = por %p66, %p67
      %p70 = scmp.ne.s32.totalorder %s53, %s69
      %p71 = scmp.eq.s32.totalorder %s19, 0
      %p72 = por %p70, %p71
      %p73 = scmp.le.s32.totalorder 1, %s13
      %p74 = scmp.lt.s32.totalorder %s13, 5
      %p75 = pnand %p73, %p74
      %p76 = pneg %p75
      // Predicated region
      $region9: #{tpu_custom_call.1} parent=5 // pred_check
        _
      $region10: #{tpu_custom_call.1} parent=5 // pred_check_branch
        %78 = sbr.rel (%p75) target = $region12
      $region11: #{tpu_custom_call.1} parent=5 // pred_region
        %s79 = ssub.s32 %s13, 1
      $region12: #{tpu_custom_call.1} parent=5 // pred_fallthru
        _
      %p80 = scmp.lt.s32.totalorder %s13, 4
      // Predicated region
      $region13: #{tpu_custom_call.1} parent=5 // pred_check
        %p81 = pneg %p80
      $region14: #{tpu_custom_call.1} parent=5 // pred_check_branch
        %83 = sbr.rel (%p81) target = $region16
      $region15: #{tpu_custom_call.1} parent=5 // pred_region
        // Predicated region
        $region17: #{tpu_custom_call.1} parent=15 // pred_check
          %p84 = pneg %p33
        $region18: #{tpu_custom_call.1} parent=15 // pred_check_branch
          %86 = sbr.rel (%p84) target = $region20
        $region19: #{tpu_custom_call.1} parent=15 // pred_region
          #allocation7 [shape = 'u32[6]{0}', space=smem, size = 0x18, scoped, tag = 'DMA stride descriptor']
          %s87 = sand.u32 %s23, 1
          %s88 = scalar_lea.sflag [#allocation3], %s87
          %s89 = sand.u32 %s23, 1
          %s90 = smul.addr %s89, 1152
          %s91 = scalar_lea.vmem [#allocation2], %s90
          %s92 = smul.u32 12, %s13
          %s94 = ssub.s32 18432, 18432
          %95 = vsyncadd %s88, %s94
          %s96 = smul.addr %s92, 4
          %s97 = smul.addr %s96, 128
          %s98 = scalar_lea.hbm %s0, %s97
          %s100 = sshll.u32 1, 14
          %s101 = sxor.u32 4294967295, %s100
          %s103 = sld [smem:[#allocation0]]
          %s104 = sadd.s32 2, %s103
          %s106 = sshll.u32 7, 26
          %s107 = sxor.u32 4294967295, %s106
          %s108 = sand.u32 0, %s107
          %s109 = sshll.u32 %s104, 26
          %s110 = sor.u32 %s108, %s109
          %s111 = sshll.u32 %s91, 4
          %s112 = int_to_ptr.vmem [resolvable:$true] %s111
          %118 = sst [smem:[#allocation7]] 24576
          %s119 = scalar_lea.smem [#allocation7], 1
          %120 = sst [smem:[%s119]] 6144
          %s121 = scalar_lea.smem [#allocation7], 2
          %122 = sst [smem:[%s121]] 12
          %s123 = scalar_lea.smem [#allocation7], 3
          %124 = sst [smem:[%s123]] 512
          %s125 = scalar_lea.smem [#allocation7], 4
          %126 = sst [smem:[%s125]] 512
          %s127 = scalar_lea.smem [#allocation7], 5
          %128 = sst [smem:[%s127]] 32
          %130 = dma.general %s98, 18432, %s112, %s88, [#allocation6], [#allocation7], %s110, 0
        $region20: #{tpu_custom_call.1} parent=15 // pred_fallthru
          _
      $region16: #{tpu_custom_call.1} parent=5 // pred_fallthru
        _
      %p131 = scmp.le.s32.totalorder 1, %s13
      %p132 = scmp.lt.s32.totalorder %s13, 5
      %p133 = pnand %p131, %p132
      %p134 = pneg %p133
      // Predicated region
      $region21: #{tpu_custom_call.1} parent=5 // pred_check
        _
      $region22: #{tpu_custom_call.1} parent=5 // pred_check_branch
        %136 = sbr.rel (%p133) target = $region24
      $region23: #{tpu_custom_call.1} parent=5 // pred_region
        %s137 = ssub.s32 %s13, 1
        %s138 = sand.u32 %s26, 1
        %s139 = scalar_lea.sflag [#allocation3], %s138
        %s140 = sand.u32 %s26, 1
        %s141 = smul.addr %s140, 1152
        %s142 = scalar_lea.vmem [#allocation2], %s141
        // Predicated region
        $region25: #{tpu_custom_call.1} parent=23 // pred_check
          %p143 = pneg %p39
        $region26: #{tpu_custom_call.1} parent=23 // pred_check_branch
          %145 = sbr.rel (%p143) target = $region28
        $region27: #{tpu_custom_call.1} parent=23 // pred_region
          %146 = dma.done %s139, 18432
        $region28: #{tpu_custom_call.1} parent=23 // pred_fallthru
          _
        %s147 = sand.u32 %s26, 1
        %s148 = scalar_lea.sflag [#allocation3], %s147
        %s149 = sand.u32 %s26, 1
        %s150 = smul.addr %s149, 1152
        %s151 = scalar_lea.vmem [#allocation2], %s150
        %p152 = pneg %p39
        %p153 = pneg %p36
        %p154 = pneg %p65
        %p155 = pneg %p62
        %s156 = sand.u32 %s52, 1
        %s157 = scalar_lea.sflag [#allocation4], %s156
        %s158 = sand.u32 %s52, 1
        %s159 = smul.addr %s158, 1152
        %s160 = scalar_lea.vmem [#allocation5], %s159
        %s161 = smul.u32 12, %s18
        %s162 = smul.u32 12, %s18
        %v163 = vld [vmem:[%s142] sm:$0xff]
        %v164 = vld [vmem:[%s142 + $0x8] sm:$0xff]
        %v165 = vld [vmem:[%s142 + $0x10] sm:$0xff]
        %v166 = vld [vmem:[%s142 + $0x18] sm:$0xff]
        %v167 = vld [vmem:[%s142 + $0x20] sm:$0xff]
        %v168 = vld [vmem:[%s142 + $0x28] sm:$0xff]
        %v169 = vld [vmem:[%s142 + $0x30] sm:$0xff]
        %v170 = vld [vmem:[%s142 + $0x38] sm:$0xff]
        %v171 = vld [vmem:[%s142 + $0x40] sm:$0xff]
        %v172 = vld [vmem:[%s142 + $0x48] sm:$0xff]
        %v173 = vld [vmem:[%s142 + $0x50] sm:$0xff]
        %v174 = vld [vmem:[%s142 + $0x58] sm:$0xff]
        %v175 = vld [vmem:[%s142 + $0x60] sm:$0xff]
        %v176 = vld [vmem:[%s142 + $0x68] sm:$0xff]
        %v177 = vld [vmem:[%s142 + $0x70] sm:$0xff]
        %v178 = vld [vmem:[%s142 + $0x78] sm:$0xff]
        %v179 = vld [vmem:[%s142 + $0x80] sm:$0xff]
        %v180 = vld [vmem:[%s142 + $0x88] sm:$0xff]
        %v181 = vld [vmem:[%s142 + $0x90] sm:$0xff]
        %v182 = vld [vmem:[%s142 + $0x98] sm:$0xff]
        %v183 = vld [vmem:[%s142 + $0xa0] sm:$0xff]
        %v184 = vld [vmem:[%s142 + $0xa8] sm:$0xff]
        %v185 = vld [vmem:[%s142 + $0xb0] sm:$0xff]
        %v186 = vld [vmem:[%s142 + $0xb8] sm:$0xff]
        %v187 = vld [vmem:[%s142 + $0xc0] sm:$0xff]
        %v188 = vld [vmem:[%s142 + $0xc8] sm:$0xff]
        %v189 = vld [vmem:[%s142 + $0xd0] sm:$0xff]
        %v190 = vld [vmem:[%s142 + $0xd8] sm:$0xff]
        %v191 = vld [vmem:[%s142 + $0xe0] sm:$0xff]
        %v192 = vld [vmem:[%s142 + $0xe8] sm:$0xff]
        %v193 = vld [vmem:[%s142 + $0xf0] sm:$0xff]
        %v194 = vld [vmem:[%s142 + $0xf8] sm:$0xff]
        %v195 = vld [vmem:[%s142 + $0x100] sm:$0xff]
        %v196 = vld [vmem:[%s142 + $0x108] sm:$0xff]
        %v197 = vld [vmem:[%s142 + $0x110] sm:$0xff]
        %v198 = vld [vmem:[%s142 + $0x118] sm:$0xff]
        %v199 = vld [vmem:[%s142 + $0x120] sm:$0xff]
        %v200 = vld [vmem:[%s142 + $0x128] sm:$0xff]
        %v201 = vld [vmem:[%s142 + $0x130] sm:$0xff]
        %v202 = vld [vmem:[%s142 + $0x138] sm:$0xff]
        %v203 = vld [vmem:[%s142 + $0x140] sm:$0xff]
        %v204 = vld [vmem:[%s142 + $0x148] sm:$0xff]
        %v205 = vld [vmem:[%s142 + $0x150] sm:$0xff]
        %v206 = vld [vmem:[%s142 + $0x158] sm:$0xff]
        %v207 = vld [vmem:[%s142 + $0x160] sm:$0xff]
        %v208 = vld [vmem:[%s142 + $0x168] sm:$0xff]
        %v209 = vld [vmem:[%s142 + $0x170] sm:$0xff]
        %v210 = vld [vmem:[%s142 + $0x178] sm:$0xff]
        %s211 = scalar_lea.vmem %s142, 384 [#allocation2]
        %v212 = vld [vmem:[%s211] sm:$0xff]
        %v213 = vld [vmem:[%s211 + $0x8] sm:$0xff]
        %v214 = vld [vmem:[%s211 + $0x10] sm:$0xff]
        %v215 = vld [vmem:[%s211 + $0x18] sm:$0xff]
        %v216 = vld [vmem:[%s211 + $0x20] sm:$0xff]
        %v217 = vld [vmem:[%s211 + $0x28] sm:$0xff]
        %v218 = vld [vmem:[%s211 + $0x30] sm:$0xff]
        %v219 = vld [vmem:[%s211 + $0x38] sm:$0xff]
        %v220 = vld [vmem:[%s211 + $0x40] sm:$0xff]
        %v221 = vld [vmem:[%s211 + $0x48] sm:$0xff]
        %v222 = vld [vmem:[%s211 + $0x50] sm:$0xff]
        %v223 = vld [vmem:[%s211 + $0x58] sm:$0xff]
        %v224 = vld [vmem:[%s211 + $0x60] sm:$0xff]
        %v225 = vld [vmem:[%s211 + $0x68] sm:$0xff]
        %v226 = vld [vmem:[%s211 + $0x70] sm:$0xff]
        %v227 = vld [vmem:[%s211 + $0x78] sm:$0xff]
        %v228 = vld [vmem:[%s211 + $0x80] sm:$0xff]
        %v229 = vld [vmem:[%s211 + $0x88] sm:$0xff]
        %v230 = vld [vmem:[%s211 + $0x90] sm:$0xff]
        %v231 = vld [vmem:[%s211 + $0x98] sm:$0xff]
        %v232 = vld [vmem:[%s211 + $0xa0] sm:$0xff]
        %v233 = vld [vmem:[%s211 + $0xa8] sm:$0xff]
        %v234 = vld [vmem:[%s211 + $0xb0] sm:$0xff]
        %v235 = vld [vmem:[%s211 + $0xb8] sm:$0xff]
        %v236 = vld [vmem:[%s211 + $0xc0] sm:$0xff]
        %v237 = vld [vmem:[%s211 + $0xc8] sm:$0xff]
        %v238 = vld [vmem:[%s211 + $0xd0] sm:$0xff]
        %v239 = vld [vmem:[%s211 + $0xd8] sm:$0xff]
        %v240 = vld [vmem:[%s211 + $0xe0] sm:$0xff]
        %v241 = vld [vmem:[%s211 + $0xe8] sm:$0xff]
        %v242 = vld [vmem:[%s211 + $0xf0] sm:$0xff]
        %v243 = vld [vmem:[%s211 + $0xf8] sm:$0xff]
        %v244 = vld [vmem:[%s211 + $0x100] sm:$0xff]
        %v245 = vld [vmem:[%s211 + $0x108] sm:$0xff]
        %v246 = vld [vmem:[%s211 + $0x110] sm:$0xff]
        %v247 = vld [vmem:[%s211 + $0x118] sm:$0xff]
        %v248 = vld [vmem:[%s211 + $0x120] sm:$0xff]
        %v249 = vld [vmem:[%s211 + $0x128] sm:$0xff]
        %v250 = vld [vmem:[%s211 + $0x130] sm:$0xff]
        %v251 = vld [vmem:[%s211 + $0x138] sm:$0xff]
        %v252 = vld [vmem:[%s211 + $0x140] sm:$0xff]
        %v253 = vld [vmem:[%s211 + $0x148] sm:$0xff]
        %v254 = vld [vmem:[%s211 + $0x150] sm:$0xff]
        %v255 = vld [vmem:[%s211 + $0x158] sm:$0xff]
        %v256 = vld [vmem:[%s211 + $0x160] sm:$0xff]
        %v257 = vld [vmem:[%s211 + $0x168] sm:$0xff]
        %v258 = vld [vmem:[%s211 + $0x170] sm:$0xff]
        %v259 = vld [vmem:[%s211 + $0x178] sm:$0xff]
        %s260 = scalar_lea.vmem %s142, 768 [#allocation2]
        %v261 = vld [vmem:[%s260] sm:$0xff]
        %v262 = vld [vmem:[%s260 + $0x8] sm:$0xff]
        %v263 = vld [vmem:[%s260 + $0x10] sm:$0xff]
        %v264 = vld [vmem:[%s260 + $0x18] sm:$0xff]
        %v265 = vld [vmem:[%s260 + $0x20] sm:$0xff]
        %v266 = vld [vmem:[%s260 + $0x28] sm:$0xff]
        %v267 = vld [vmem:[%s260 + $0x30] sm:$0xff]
        %v268 = vld [vmem:[%s260 + $0x38] sm:$0xff]
        %v269 = vld [vmem:[%s260 + $0x40] sm:$0xff]
        %v270 = vld [vmem:[%s260 + $0x48] sm:$0xff]
        %v271 = vld [vmem:[%s260 + $0x50] sm:$0xff]
        %v272 = vld [vmem:[%s260 + $0x58] sm:$0xff]
        %v273 = vld [vmem:[%s260 + $0x60] sm:$0xff]
        %v274 = vld [vmem:[%s260 + $0x68] sm:$0xff]
        %v275 = vld [vmem:[%s260 + $0x70] sm:$0xff]
        %v276 = vld [vmem:[%s260 + $0x78] sm:$0xff]
        %v277 = vld [vmem:[%s260 + $0x80] sm:$0xff]
        %v278 = vld [vmem:[%s260 + $0x88] sm:$0xff]
        %v279 = vld [vmem:[%s260 + $0x90] sm:$0xff]
        %v280 = vld [vmem:[%s260 + $0x98] sm:$0xff]
        %v281 = vld [vmem:[%s260 + $0xa0] sm:$0xff]
        %v282 = vld [vmem:[%s260 + $0xa8] sm:$0xff]
        %v283 = vld [vmem:[%s260 + $0xb0] sm:$0xff]
        %v284 = vld [vmem:[%s260 + $0xb8] sm:$0xff]
        %v285 = vld [vmem:[%s260 + $0xc0] sm:$0xff]
        %v286 = vld [vmem:[%s260 + $0xc8] sm:$0xff]
        %v287 = vld [vmem:[%s260 + $0xd0] sm:$0xff]
        %v288 = vld [vmem:[%s260 + $0xd8] sm:$0xff]
        %v289 = vld [vmem:[%s260 + $0xe0] sm:$0xff]
        %v290 = vld [vmem:[%s260 + $0xe8] sm:$0xff]
        %v291 = vld [vmem:[%s260 + $0xf0] sm:$0xff]
        %v292 = vld [vmem:[%s260 + $0xf8] sm:$0xff]
        %v293 = vld [vmem:[%s260 + $0x100] sm:$0xff]
        %v294 = vld [vmem:[%s260 + $0x108] sm:$0xff]
        %v295 = vld [vmem:[%s260 + $0x110] sm:$0xff]
        %v296 = vld [vmem:[%s260 + $0x118] sm:$0xff]
        %v297 = vld [vmem:[%s260 + $0x120] sm:$0xff]
        %v298 = vld [vmem:[%s260 + $0x128] sm:$0xff]
        %v299 = vld [vmem:[%s260 + $0x130] sm:$0xff]
        %v300 = vld [vmem:[%s260 + $0x138] sm:$0xff]
        %v301 = vld [vmem:[%s260 + $0x140] sm:$0xff]
        %v302 = vld [vmem:[%s260 + $0x148] sm:$0xff]
        %v303 = vld [vmem:[%s260 + $0x150] sm:$0xff]
        %v304 = vld [vmem:[%s260 + $0x158] sm:$0xff]
        %v305 = vld [vmem:[%s260 + $0x160] sm:$0xff]
        %v306 = vld [vmem:[%s260 + $0x168] sm:$0xff]
        %v307 = vld [vmem:[%s260 + $0x170] sm:$0xff]
        %v308 = vld [vmem:[%s260 + $0x178] sm:$0xff]
        %v309 = vmul.f32 %v163, 6.0
        %v310 = vmul.f32 %v164, 6.0
        %v311 = vmul.f32 %v165, 6.0
        %v312 = vmul.f32 %v166, 6.0
        %v313 = vmul.f32 %v167, 6.0
        %v314 = vmul.f32 %v168, 6.0
        %v315 = vmul.f32 %v169, 6.0
        %v316 = vmul.f32 %v170, 6.0
        %v317 = vmul.f32 %v171, 6.0
        %v318 = vmul.f32 %v172, 6.0
        %v319 = vmul.f32 %v173, 6.0
        %v320 = vmul.f32 %v174, 6.0
        %v321 = vmul.f32 %v175, 6.0
        %v322 = vmul.f32 %v176, 6.0
        %v323 = vmul.f32 %v177, 6.0
        %v324 = vmul.f32 %v178, 6.0
        %v325 = vmul.f32 %v179, 6.0
        %v326 = vmul.f32 %v180, 6.0
        %v327 = vmul.f32 %v181, 6.0
        %v328 = vmul.f32 %v182, 6.0
        %v329 = vmul.f32 %v183, 6.0
        %v330 = vmul.f32 %v184, 6.0
        %v331 = vmul.f32 %v185, 6.0
        %v332 = vmul.f32 %v186, 6.0
        %v333 = vmul.f32 %v187, 6.0
        %v334 = vmul.f32 %v188, 6.0
        %v335 = vmul.f32 %v189, 6.0
        %v336 = vmul.f32 %v190, 6.0
        %v337 = vmul.f32 %v191, 6.0
        %v338 = vmul.f32 %v192, 6.0
        %v339 = vmul.f32 %v193, 6.0
        %v340 = vmul.f32 %v194, 6.0
        %v341 = vmul.f32 %v195, 6.0
        %v342 = vmul.f32 %v196, 6.0
        %v343 = vmul.f32 %v197, 6.0
        %v344 = vmul.f32 %v198, 6.0
        %v345 = vmul.f32 %v199, 6.0
        %v346 = vmul.f32 %v200, 6.0
        %v347 = vmul.f32 %v201, 6.0
        %v348 = vmul.f32 %v202, 6.0
        %v349 = vmul.f32 %v203, 6.0
        %v350 = vmul.f32 %v204, 6.0
        %v351 = vmul.f32 %v205, 6.0
        %v352 = vmul.f32 %v206, 6.0
        %v353 = vmul.f32 %v207, 6.0
        %v354 = vmul.f32 %v208, 6.0
        %v355 = vmul.f32 %v209, 6.0
        %v356 = vmul.f32 %v210, 6.0
        %v357 = vmul.f32 %v309, 0.16666667
        %v358 = vmul.f32 %v310, 0.16666667
        %v359 = vmul.f32 %v311, 0.16666667
        %v360 = vmul.f32 %v312, 0.16666667
        %v361 = vmul.f32 %v313, 0.16666667
        %v362 = vmul.f32 %v314, 0.16666667
        %v363 = vmul.f32 %v315, 0.16666667
        %v364 = vmul.f32 %v316, 0.16666667
        %v365 = vmul.f32 %v317, 0.16666667
        %v366 = vmul.f32 %v318, 0.16666667
        %v367 = vmul.f32 %v319, 0.16666667
        %v368 = vmul.f32 %v320, 0.16666667
        %v369 = vmul.f32 %v321, 0.16666667
        %v370 = vmul.f32 %v322, 0.16666667
        %v371 = vmul.f32 %v323, 0.16666667
        %v372 = vmul.f32 %v324, 0.16666667
        %v373 = vmul.f32 %v325, 0.16666667
        %v374 = vmul.f32 %v326, 0.16666667
        %v375 = vmul.f32 %v327, 0.16666667
        %v376 = vmul.f32 %v328, 0.16666667
        %v377 = vmul.f32 %v329, 0.16666667
        %v378 = vmul.f32 %v330, 0.16666667
        %v379 = vmul.f32 %v331, 0.16666667
        %v380 = vmul.f32 %v332, 0.16666667
        %v381 = vmul.f32 %v333, 0.16666667
        %v382 = vmul.f32 %v334, 0.16666667
        %v383 = vmul.f32 %v335, 0.16666667
        %v384 = vmul.f32 %v336, 0.16666667
        %v385 = vmul.f32 %v337, 0.16666667
        %v386 = vmul.f32 %v338, 0.16666667
        %v387 = vmul.f32 %v339, 0.16666667
        %v388 = vmul.f32 %v340, 0.16666667
        %v389 = vmul.f32 %v341, 0.16666667
        %v390 = vmul.f32 %v342, 0.16666667
        %v391 = vmul.f32 %v343, 0.16666667
        %v392 = vmul.f32 %v344, 0.16666667
        %v393 = vmul.f32 %v345, 0.16666667
        %v394 = vmul.f32 %v346, 0.16666667
        %v395 = vmul.f32 %v347, 0.16666667
        %v396 = vmul.f32 %v348, 0.16666667
        %v397 = vmul.f32 %v349, 0.16666667
        %v398 = vmul.f32 %v350, 0.16666667
        %v399 = vmul.f32 %v351, 0.16666667
        %v400 = vmul.f32 %v352, 0.16666667
        %v401 = vmul.f32 %v353, 0.16666667
        %v402 = vmul.f32 %v354, 0.16666667
        %v403 = vmul.f32 %v355, 0.16666667
        %v404 = vmul.f32 %v356, 0.16666667
        %v405 = vfloor.f32 %v357
        %v406 = vfloor.f32 %v358
        %v407 = vfloor.f32 %v359
        %v408 = vfloor.f32 %v360
        %v409 = vfloor.f32 %v361
        %v410 = vfloor.f32 %v362
        %v411 = vfloor.f32 %v363
        %v412 = vfloor.f32 %v364
        %v413 = vfloor.f32 %v365
        %v414 = vfloor.f32 %v366
        %v415 = vfloor.f32 %v367
        %v416 = vfloor.f32 %v368
        %v417 = vfloor.f32 %v369
        %v418 = vfloor.f32 %v370
        %v419 = vfloor.f32 %v371
        %v420 = vfloor.f32 %v372
        %v421 = vfloor.f32 %v373
        %v422 = vfloor.f32 %v374
        %v423 = vfloor.f32 %v375
        %v424 = vfloor.f32 %v376
        %v425 = vfloor.f32 %v377
        %v426 = vfloor.f32 %v378
        %v427 = vfloor.f32 %v379
        %v428 = vfloor.f32 %v380
        %v429 = vfloor.f32 %v381
        %v430 = vfloor.f32 %v382
        %v431 = vfloor.f32 %v383
        %v432 = vfloor.f32 %v384
        %v433 = vfloor.f32 %v385
        %v434 = vfloor.f32 %v386
        %v435 = vfloor.f32 %v387
        %v436 = vfloor.f32 %v388
        %v437 = vfloor.f32 %v389
        %v438 = vfloor.f32 %v390
        %v439 = vfloor.f32 %v391
        %v440 = vfloor.f32 %v392
        %v441 = vfloor.f32 %v393
        %v442 = vfloor.f32 %v394
        %v443 = vfloor.f32 %v395
        %v444 = vfloor.f32 %v396
        %v445 = vfloor.f32 %v397
        %v446 = vfloor.f32 %v398
        %v447 = vfloor.f32 %v399
        %v448 = vfloor.f32 %v400
        %v449 = vfloor.f32 %v401
        %v450 = vfloor.f32 %v402
        %v451 = vfloor.f32 %v403
        %v452 = vfloor.f32 %v404
        %v453 = vmul.f32 %v405, 6.0
        %v454 = vmul.f32 %v406, 6.0
        %v455 = vmul.f32 %v407, 6.0
        %v456 = vmul.f32 %v408, 6.0
        %v457 = vmul.f32 %v409, 6.0
        %v458 = vmul.f32 %v410, 6.0
        %v459 = vmul.f32 %v411, 6.0
        %v460 = vmul.f32 %v412, 6.0
        %v461 = vmul.f32 %v413, 6.0
        %v462 = vmul.f32 %v414, 6.0
        %v463 = vmul.f32 %v415, 6.0
        %v464 = vmul.f32 %v416, 6.0
        %v465 = vmul.f32 %v417, 6.0
        %v466 = vmul.f32 %v418, 6.0
        %v467 = vmul.f32 %v419, 6.0
        %v468 = vmul.f32 %v420, 6.0
        %v469 = vmul.f32 %v421, 6.0
        %v470 = vmul.f32 %v422, 6.0
        %v471 = vmul.f32 %v423, 6.0
        %v472 = vmul.f32 %v424, 6.0
        %v473 = vmul.f32 %v425, 6.0
        %v474 = vmul.f32 %v426, 6.0
        %v475 = vmul.f32 %v427, 6.0
        %v476 = vmul.f32 %v428, 6.0
        %v477 = vmul.f32 %v429, 6.0
        %v478 = vmul.f32 %v430, 6.0
        %v479 = vmul.f32 %v431, 6.0
        %v480 = vmul.f32 %v432, 6.0
        %v481 = vmul.f32 %v433, 6.0
        %v482 = vmul.f32 %v434, 6.0
        %v483 = vmul.f32 %v435, 6.0
        %v484 = vmul.f32 %v436, 6.0
        %v485 = vmul.f32 %v437, 6.0
        %v486 = vmul.f32 %v438, 6.0
        %v487 = vmul.f32 %v439, 6.0
        %v488 = vmul.f32 %v440, 6.0
        %v489 = vmul.f32 %v441, 6.0
        %v490 = vmul.f32 %v442, 6.0
        %v491 = vmul.f32 %v443, 6.0
        %v492 = vmul.f32 %v444, 6.0
        %v493 = vmul.f32 %v445, 6.0
        %v494 = vmul.f32 %v446, 6.0
        %v495 = vmul.f32 %v447, 6.0
        %v496 = vmul.f32 %v448, 6.0
        %v497 = vmul.f32 %v449, 6.0
        %v498 = vmul.f32 %v450, 6.0
        %v499 = vmul.f32 %v451, 6.0
        %v500 = vmul.f32 %v452, 6.0
        %v501 = vsub.f32 %v309, %v453
        %v502 = vsub.f32 %v310, %v454
        %v503 = vsub.f32 %v311, %v455
        %v504 = vsub.f32 %v312, %v456
        %v505 = vsub.f32 %v313, %v457
        %v506 = vsub.f32 %v314, %v458
        %v507 = vsub.f32 %v315, %v459
        %v508 = vsub.f32 %v316, %v460
        %v509 = vsub.f32 %v317, %v461
        %v510 = vsub.f32 %v318, %v462
        %v511 = vsub.f32 %v319, %v463
        %v512 = vsub.f32 %v320, %v464
        %v513 = vsub.f32 %v321, %v465
        %v514 = vsub.f32 %v322, %v466
        %v515 = vsub.f32 %v323, %v467
        %v516 = vsub.f32 %v324, %v468
        %v517 = vsub.f32 %v325, %v469
        %v518 = vsub.f32 %v326, %v470
        %v519 = vsub.f32 %v327, %v471
        %v520 = vsub.f32 %v328, %v472
        %v521 = vsub.f32 %v329, %v473
        %v522 = vsub.f32 %v330, %v474
        %v523 = vsub.f32 %v331, %v475
        %v524 = vsub.f32 %v332, %v476
        %v525 = vsub.f32 %v333, %v477
        %v526 = vsub.f32 %v334, %v478
        %v527 = vsub.f32 %v335, %v479
        %v528 = vsub.f32 %v336, %v480
        %v529 = vsub.f32 %v337, %v481
        %v530 = vsub.f32 %v338, %v482
        %v531 = vsub.f32 %v339, %v483
        %v532 = vsub.f32 %v340, %v484
        %v533 = vsub.f32 %v341, %v485
        %v534 = vsub.f32 %v342, %v486
        %v535 = vsub.f32 %v343, %v487
        %v536 = vsub.f32 %v344, %v488
        %v537 = vsub.f32 %v345, %v489
        %v538 = vsub.f32 %v346, %v490
        %v539 = vsub.f32 %v347, %v491
        %v540 = vsub.f32 %v348, %v492
        %v541 = vsub.f32 %v349, %v493
        %v542 = vsub.f32 %v350, %v494
        %v543 = vsub.f32 %v351, %v495
        %v544 = vsub.f32 %v352, %v496
        %v545 = vsub.f32 %v353, %v497
        %v546 = vsub.f32 %v354, %v498
        %v547 = vsub.f32 %v355, %v499
        %v548 = vsub.f32 %v356, %v500
        %v549 = vfloor.f32 %v501
        %v550 = vfloor.f32 %v502
        %v551 = vfloor.f32 %v503
        %v552 = vfloor.f32 %v504
        %v553 = vfloor.f32 %v505
        %v554 = vfloor.f32 %v506
        %v555 = vfloor.f32 %v507
        %v556 = vfloor.f32 %v508
        %v557 = vfloor.f32 %v509
        %v558 = vfloor.f32 %v510
        %v559 = vfloor.f32 %v511
        %v560 = vfloor.f32 %v512
        %v561 = vfloor.f32 %v513
        %v562 = vfloor.f32 %v514
        %v563 = vfloor.f32 %v515
        %v564 = vfloor.f32 %v516
        %v565 = vfloor.f32 %v517
        %v566 = vfloor.f32 %v518
        %v567 = vfloor.f32 %v519
        %v568 = vfloor.f32 %v520
        %v569 = vfloor.f32 %v521
        %v570 = vfloor.f32 %v522
        %v571 = vfloor.f32 %v523
        %v572 = vfloor.f32 %v524
        %v573 = vfloor.f32 %v525
        %v574 = vfloor.f32 %v526
        %v575 = vfloor.f32 %v527
        %v576 = vfloor.f32 %v528
        %v577 = vfloor.f32 %v529
        %v578 = vfloor.f32 %v530
        %v579 = vfloor.f32 %v531
        %v580 = vfloor.f32 %v532
        %v581 = vfloor.f32 %v533
        %v582 = vfloor.f32 %v534
        %v583 = vfloor.f32 %v535
        %v584 = vfloor.f32 %v536
        %v585 = vfloor.f32 %v537
        %v586 = vfloor.f32 %v538
        %v587 = vfloor.f32 %v539
        %v588 = vfloor.f32 %v540
        %v589 = vfloor.f32 %v541
        %v590 = vfloor.f32 %v542
        %v591 = vfloor.f32 %v543
        %v592 = vfloor.f32 %v544
        %v593 = vfloor.f32 %v545
        %v594 = vfloor.f32 %v546
        %v595 = vfloor.f32 %v547
        %v596 = vfloor.f32 %v548
        %v597 = vsub.f32 %v501, %v549
        %v598 = vsub.f32 %v502, %v550
        %v599 = vsub.f32 %v503, %v551
        %v600 = vsub.f32 %v504, %v552
        %v601 = vsub.f32 %v505, %v553
        %v602 = vsub.f32 %v506, %v554
        %v603 = vsub.f32 %v507, %v555
        %v604 = vsub.f32 %v508, %v556
        %v605 = vsub.f32 %v509, %v557
        %v606 = vsub.f32 %v510, %v558
        %v607 = vsub.f32 %v511, %v559
        %v608 = vsub.f32 %v512, %v560
        %v609 = vsub.f32 %v513, %v561
        %v610 = vsub.f32 %v514, %v562
        %v611 = vsub.f32 %v515, %v563
        %v612 = vsub.f32 %v516, %v564
        %v613 = vsub.f32 %v517, %v565
        %v614 = vsub.f32 %v518, %v566
        %v615 = vsub.f32 %v519, %v567
        %v616 = vsub.f32 %v520, %v568
        %v617 = vsub.f32 %v521, %v569
        %v618 = vsub.f32 %v522, %v570
        %v619 = vsub.f32 %v523, %v571
        %v620 = vsub.f32 %v524, %v572
        %v621 = vsub.f32 %v525, %v573
        %v622 = vsub.f32 %v526, %v574
        %v623 = vsub.f32 %v527, %v575
        %v624 = vsub.f32 %v528, %v576
        %v625 = vsub.f32 %v529, %v577
        %v626 = vsub.f32 %v530, %v578
        %v627 = vsub.f32 %v531, %v579
        %v628 = vsub.f32 %v532, %v580
        %v629 = vsub.f32 %v533, %v581
        %v630 = vsub.f32 %v534, %v582
        %v631 = vsub.f32 %v535, %v583
        %v632 = vsub.f32 %v536, %v584
        %v633 = vsub.f32 %v537, %v585
        %v634 = vsub.f32 %v538, %v586
        %v635 = vsub.f32 %v539, %v587
        %v636 = vsub.f32 %v540, %v588
        %v637 = vsub.f32 %v541, %v589
        %v638 = vsub.f32 %v542, %v590
        %v639 = vsub.f32 %v543, %v591
        %v640 = vsub.f32 %v544, %v592
        %v641 = vsub.f32 %v545, %v593
        %v642 = vsub.f32 %v546, %v594
        %v643 = vsub.f32 %v547, %v595
        %v644 = vsub.f32 %v548, %v596
        %v645 = vsub.f32 1.0, %v212
        %v646 = vsub.f32 1.0, %v213
        %v647 = vsub.f32 1.0, %v214
        %v648 = vsub.f32 1.0, %v215
        %v649 = vsub.f32 1.0, %v216
        %v650 = vsub.f32 1.0, %v217
        %v651 = vsub.f32 1.0, %v218
        %v652 = vsub.f32 1.0, %v219
        %v653 = vsub.f32 1.0, %v220
        %v654 = vsub.f32 1.0, %v221
        %v655 = vsub.f32 1.0, %v222
        %v656 = vsub.f32 1.0, %v223
        %v657 = vsub.f32 1.0, %v224
        %v658 = vsub.f32 1.0, %v225
        %v659 = vsub.f32 1.0, %v226
        %v660 = vsub.f32 1.0, %v227
        %v661 = vsub.f32 1.0, %v228
        %v662 = vsub.f32 1.0, %v229
        %v663 = vsub.f32 1.0, %v230
        %v664 = vsub.f32 1.0, %v231
        %v665 = vsub.f32 1.0, %v232
        %v666 = vsub.f32 1.0, %v233
        %v667 = vsub.f32 1.0, %v234
        %v668 = vsub.f32 1.0, %v235
        %v669 = vsub.f32 1.0, %v236
        %v670 = vsub.f32 1.0, %v237
        %v671 = vsub.f32 1.0, %v238
        %v672 = vsub.f32 1.0, %v239
        %v673 = vsub.f32 1.0, %v240
        %v674 = vsub.f32 1.0, %v241
        %v675 = vsub.f32 1.0, %v242
        %v676 = vsub.f32 1.0, %v243
        %v677 = vsub.f32 1.0, %v244
        %v678 = vsub.f32 1.0, %v245
        %v679 = vsub.f32 1.0, %v246
        %v680 = vsub.f32 1.0, %v247
        %v681 = vsub.f32 1.0, %v248
        %v682 = vsub.f32 1.0, %v249
        %v683 = vsub.f32 1.0, %v250
        %v684 = vsub.f32 1.0, %v251
        %v685 = vsub.f32 1.0, %v252
        %v686 = vsub.f32 1.0, %v253
        %v687 = vsub.f32 1.0, %v254
        %v688 = vsub.f32 1.0, %v255
        %v689 = vsub.f32 1.0, %v256
        %v690 = vsub.f32 1.0, %v257
        %v691 = vsub.f32 1.0, %v258
        %v692 = vsub.f32 1.0, %v259
        %v693 = vmul.f32 %v261, %v645
        %v694 = vmul.f32 %v262, %v646
        %v695 = vmul.f32 %v263, %v647
        %v696 = vmul.f32 %v264, %v648
        %v697 = vmul.f32 %v265, %v649
        %v698 = vmul.f32 %v266, %v650
        %v699 = vmul.f32 %v267, %v651
        %v700 = vmul.f32 %v268, %v652
        %v701 = vmul.f32 %v269, %v653
        %v702 = vmul.f32 %v270, %v654
        %v703 = vmul.f32 %v271, %v655
        %v704 = vmul.f32 %v272, %v656
        %v705 = vmul.f32 %v273, %v657
        %v706 = vmul.f32 %v274, %v658
        %v707 = vmul.f32 %v275, %v659
        %v708 = vmul.f32 %v276, %v660
        %v709 = vmul.f32 %v277, %v661
        %v710 = vmul.f32 %v278, %v662
        %v711 = vmul.f32 %v279, %v663
        %v712 = vmul.f32 %v280, %v664
        %v713 = vmul.f32 %v281, %v665
        %v714 = vmul.f32 %v282, %v666
        %v715 = vmul.f32 %v283, %v667
        %v716 = vmul.f32 %v284, %v668
        %v717 = vmul.f32 %v285, %v669
        %v718 = vmul.f32 %v286, %v670
        %v719 = vmul.f32 %v287, %v671
        %v720 = vmul.f32 %v288, %v672
        %v721 = vmul.f32 %v289, %v673
        %v722 = vmul.f32 %v290, %v674
        %v723 = vmul.f32 %v291, %v675
        %v724 = vmul.f32 %v292, %v676
        %v725 = vmul.f32 %v293, %v677
        %v726 = vmul.f32 %v294, %v678
        %v727 = vmul.f32 %v295, %v679
        %v728 = vmul.f32 %v296, %v680
        %v729 = vmul.f32 %v297, %v681
        %v730 = vmul.f32 %v298, %v682
        %v731 = vmul.f32 %v299, %v683
        %v732 = vmul.f32 %v300, %v684
        %v733 = vmul.f32 %v301, %v685
        %v734 = vmul.f32 %v302, %v686
        %v735 = vmul.f32 %v303, %v687
        %v736 = vmul.f32 %v304, %v688
        %v737 = vmul.f32 %v305, %v689
        %v738 = vmul.f32 %v306, %v690
        %v739 = vmul.f32 %v307, %v691
        %v740 = vmul.f32 %v308, %v692
        %v741 = vmul.f32 %v597, %v212
        %v742 = vmul.f32 %v598, %v213
        %v743 = vmul.f32 %v599, %v214
        %v744 = vmul.f32 %v600, %v215
        %v745 = vmul.f32 %v601, %v216
        %v746 = vmul.f32 %v602, %v217
        %v747 = vmul.f32 %v603, %v218
        %v748 = vmul.f32 %v604, %v219
        %v749 = vmul.f32 %v605, %v220
        %v750 = vmul.f32 %v606, %v221
        %v751 = vmul.f32 %v607, %v222
        %v752 = vmul.f32 %v608, %v223
        %v753 = vmul.f32 %v609, %v224
        %v754 = vmul.f32 %v610, %v225
        %v755 = vmul.f32 %v611, %v226
        %v756 = vmul.f32 %v612, %v227
        %v757 = vmul.f32 %v613, %v228
        %v758 = vmul.f32 %v614, %v229
        %v759 = vmul.f32 %v615, %v230
        %v760 = vmul.f32 %v616, %v231
        %v761 = vmul.f32 %v617, %v232
        %v762 = vmul.f32 %v618, %v233
        %v763 = vmul.f32 %v619, %v234
        %v764 = vmul.f32 %v620, %v235
        %v765 = vmul.f32 %v621, %v236
        %v766 = vmul.f32 %v622, %v237
        %v767 = vmul.f32 %v623, %v238
        %v768 = vmul.f32 %v624, %v239
        %v769 = vmul.f32 %v625, %v240
        %v770 = vmul.f32 %v626, %v241
        %v771 = vmul.f32 %v627, %v242
        %v772 = vmul.f32 %v628, %v243
        %v773 = vmul.f32 %v629, %v244
        %v774 = vmul.f32 %v630, %v245
        %v775 = vmul.f32 %v631, %v246
        %v776 = vmul.f32 %v632, %v247
        %v777 = vmul.f32 %v633, %v248
        %v778 = vmul.f32 %v634, %v249
        %v779 = vmul.f32 %v635, %v250
        %v780 = vmul.f32 %v636, %v251
        %v781 = vmul.f32 %v637, %v252
        %v782 = vmul.f32 %v638, %v253
        %v783 = vmul.f32 %v639, %v254
        %v784 = vmul.f32 %v640, %v255
        %v785 = vmul.f32 %v641, %v256
        %v786 = vmul.f32 %v642, %v257
        %v787 = vmul.f32 %v643, %v258
        %v788 = vmul.f32 %v644, %v259
        %v789 = vsub.f32 1.0, %v741
        %v790 = vsub.f32 1.0, %v742
        %v791 = vsub.f32 1.0, %v743
        %v792 = vsub.f32 1.0, %v744
        %v793 = vsub.f32 1.0, %v745
        %v794 = vsub.f32 1.0, %v746
        %v795 = vsub.f32 1.0, %v747
        %v796 = vsub.f32 1.0, %v748
        %v797 = vsub.f32 1.0, %v749
        %v798 = vsub.f32 1.0, %v750
        %v799 = vsub.f32 1.0, %v751
        %v800 = vsub.f32 1.0, %v752
        %v801 = vsub.f32 1.0, %v753
        %v802 = vsub.f32 1.0, %v754
        %v803 = vsub.f32 1.0, %v755
        %v804 = vsub.f32 1.0, %v756
        %v805 = vsub.f32 1.0, %v757
        %v806 = vsub.f32 1.0, %v758
        %v807 = vsub.f32 1.0, %v759
        %v808 = vsub.f32 1.0, %v760
        %v809 = vsub.f32 1.0, %v761
        %v810 = vsub.f32 1.0, %v762
        %v811 = vsub.f32 1.0, %v763
        %v812 = vsub.f32 1.0, %v764
        %v813 = vsub.f32 1.0, %v765
        %v814 = vsub.f32 1.0, %v766
        %v815 = vsub.f32 1.0, %v767
        %v816 = vsub.f32 1.0, %v768
        %v817 = vsub.f32 1.0, %v769
        %v818 = vsub.f32 1.0, %v770
        %v819 = vsub.f32 1.0, %v771
        %v820 = vsub.f32 1.0, %v772
        %v821 = vsub.f32 1.0, %v773
        %v822 = vsub.f32 1.0, %v774
        %v823 = vsub.f32 1.0, %v775
        %v824 = vsub.f32 1.0, %v776
        %v825 = vsub.f32 1.0, %v777
        %v826 = vsub.f32 1.0, %v778
        %v827 = vsub.f32 1.0, %v779
        %v828 = vsub.f32 1.0, %v780
        %v829 = vsub.f32 1.0, %v781
        %v830 = vsub.f32 1.0, %v782
        %v831 = vsub.f32 1.0, %v783
        %v832 = vsub.f32 1.0, %v784
        %v833 = vsub.f32 1.0, %v785
        %v834 = vsub.f32 1.0, %v786
        %v835 = vsub.f32 1.0, %v787
        %v836 = vsub.f32 1.0, %v788
        %v837 = vmul.f32 %v261, %v789
        %v838 = vmul.f32 %v262, %v790
        %v839 = vmul.f32 %v263, %v791
        %v840 = vmul.f32 %v264, %v792
        %v841 = vmul.f32 %v265, %v793
        %v842 = vmul.f32 %v266, %v794
        %v843 = vmul.f32 %v267, %v795
        %v844 = vmul.f32 %v268, %v796
        %v845 = vmul.f32 %v269, %v797
        %v846 = vmul.f32 %v270, %v798
        %v847 = vmul.f32 %v271, %v799
        %v848 = vmul.f32 %v272, %v800
        %v849 = vmul.f32 %v273, %v801
        %v850 = vmul.f32 %v274, %v802
        %v851 = vmul.f32 %v275, %v803
        %v852 = vmul.f32 %v276, %v804
        %v853 = vmul.f32 %v277, %v805
        %v854 = vmul.f32 %v278, %v806
        %v855 = vmul.f32 %v279, %v807
        %v856 = vmul.f32 %v280, %v808
        %v857 = vmul.f32 %v281, %v809
        %v858 = vmul.f32 %v282, %v810
        %v859 = vmul.f32 %v283, %v811
        %v860 = vmul.f32 %v284, %v812
        %v861 = vmul.f32 %v285, %v813
        %v862 = vmul.f32 %v286, %v814
        %v863 = vmul.f32 %v287, %v815
        %v864 = vmul.f32 %v288, %v816
        %v865 = vmul.f32 %v289, %v817
        %v866 = vmul.f32 %v290, %v818
        %v867 = vmul.f32 %v291, %v819
        %v868 = vmul.f32 %v292, %v820
        %v869 = vmul.f32 %v293, %v821
        %v870 = vmul.f32 %v294, %v822
        %v871 = vmul.f32 %v295, %v823
        %v872 = vmul.f32 %v296, %v824
        %v873 = vmul.f32 %v297, %v825
        %v874 = vmul.f32 %v298, %v826
        %v875 = vmul.f32 %v299, %v827
        %v876 = vmul.f32 %v300, %v828
        %v877 = vmul.f32 %v301, %v829
        %v878 = vmul.f32 %v302, %v830
        %v879 = vmul.f32 %v303, %v831
        %v880 = vmul.f32 %v304, %v832
        %v881 = vmul.f32 %v305, %v833
        %v882 = vmul.f32 %v306, %v834
        %v883 = vmul.f32 %v307, %v835
        %v884 = vmul.f32 %v308, %v836
        %v885 = vsub.f32 1.0, %v597
        %v886 = vsub.f32 1.0, %v598
        %v887 = vsub.f32 1.0, %v599
        %v888 = vsub.f32 1.0, %v600
        %v889 = vsub.f32 1.0, %v601
        %v890 = vsub.f32 1.0, %v602
        %v891 = vsub.f32 1.0, %v603
        %v892 = vsub.f32 1.0, %v604
        %v893 = vsub.f32 1.0, %v605
        %v894 = vsub.f32 1.0, %v606
        %v895 = vsub.f32 1.0, %v607
        %v896 = vsub.f32 1.0, %v608
        %v897 = vsub.f32 1.0, %v609
        %v898 = vsub.f32 1.0, %v610
        %v899 = vsub.f32 1.0, %v611
        %v900 = vsub.f32 1.0, %v612
        %v901 = vsub.f32 1.0, %v613
        %v902 = vsub.f32 1.0, %v614
        %v903 = vsub.f32 1.0, %v615
        %v904 = vsub.f32 1.0, %v616
        %v905 = vsub.f32 1.0, %v617
        %v906 = vsub.f32 1.0, %v618
        %v907 = vsub.f32 1.0, %v619
        %v908 = vsub.f32 1.0, %v620
        %v909 = vsub.f32 1.0, %v621
        %v910 = vsub.f32 1.0, %v622
        %v911 = vsub.f32 1.0, %v623
        %v912 = vsub.f32 1.0, %v624
        %v913 = vsub.f32 1.0, %v625
        %v914 = vsub.f32 1.0, %v626
        %v915 = vsub.f32 1.0, %v627
        %v916 = vsub.f32 1.0, %v628
        %v917 = vsub.f32 1.0, %v629
        %v918 = vsub.f32 1.0, %v630
        %v919 = vsub.f32 1.0, %v631
        %v920 = vsub.f32 1.0, %v632
        %v921 = vsub.f32 1.0, %v633
        %v922 = vsub.f32 1.0, %v634
        %v923 = vsub.f32 1.0, %v635
        %v924 = vsub.f32 1.0, %v636
        %v925 = vsub.f32 1.0, %v637
        %v926 = vsub.f32 1.0, %v638
        %v927 = vsub.f32 1.0, %v639
        %v928 = vsub.f32 1.0, %v640
        %v929 = vsub.f32 1.0, %v641
        %v930 = vsub.f32 1.0, %v642
        %v931 = vsub.f32 1.0, %v643
        %v932 = vsub.f32 1.0, %v644
        %v933 = vmul.f32 %v885, %v212
        %v934 = vmul.f32 %v886, %v213
        %v935 = vmul.f32 %v887, %v214
        %v936 = vmul.f32 %v888, %v215
        %v937 = vmul.f32 %v889, %v216
        %v938 = vmul.f32 %v890, %v217
        %v939 = vmul.f32 %v891, %v218
        %v940 = vmul.f32 %v892, %v219
        %v941 = vmul.f32 %v893, %v220
        %v942 = vmul.f32 %v894, %v221
        %v943 = vmul.f32 %v895, %v222
        %v944 = vmul.f32 %v896, %v223
        %v945 = vmul.f32 %v897, %v224
        %v946 = vmul.f32 %v898, %v225
        %v947 = vmul.f32 %v899, %v226
        %v948 = vmul.f32 %v900, %v227
        %v949 = vmul.f32 %v901, %v228
        %v950 = vmul.f32 %v902, %v229
        %v951 = vmul.f32 %v903, %v230
        %v952 = vmul.f32 %v904, %v231
        %v953 = vmul.f32 %v905, %v232
        %v954 = vmul.f32 %v906, %v233
        %v955 = vmul.f32 %v907, %v234
        %v956 = vmul.f32 %v908, %v235
        %v957 = vmul.f32 %v909, %v236
        %v958 = vmul.f32 %v910, %v237
        %v959 = vmul.f32 %v911, %v238
        %v960 = vmul.f32 %v912, %v239
        %v961 = vmul.f32 %v913, %v240
        %v962 = vmul.f32 %v914, %v241
        %v963 = vmul.f32 %v915, %v242
        %v964 = vmul.f32 %v916, %v243
        %v965 = vmul.f32 %v917, %v244
        %v966 = vmul.f32 %v918, %v245
        %v967 = vmul.f32 %v919, %v246
        %v968 = vmul.f32 %v920, %v247
        %v969 = vmul.f32 %v921, %v248
        %v970 = vmul.f32 %v922, %v249
        %v971 = vmul.f32 %v923, %v250
        %v972 = vmul.f32 %v924, %v251
        %v973 = vmul.f32 %v925, %v252
        %v974 = vmul.f32 %v926, %v253
        %v975 = vmul.f32 %v927, %v254
        %v976 = vmul.f32 %v928, %v255
        %v977 = vmul.f32 %v929, %v256
        %v978 = vmul.f32 %v930, %v257
        %v979 = vmul.f32 %v931, %v258
        %v980 = vmul.f32 %v932, %v259
        %v981 = vsub.f32 1.0, %v933
        %v982 = vsub.f32 1.0, %v934
        %v983 = vsub.f32 1.0, %v935
        %v984 = vsub.f32 1.0, %v936
        %v985 = vsub.f32 1.0, %v937
        %v986 = vsub.f32 1.0, %v938
        %v987 = vsub.f32 1.0, %v939
        %v988 = vsub.f32 1.0, %v940
        %v989 = vsub.f32 1.0, %v941
        %v990 = vsub.f32 1.0, %v942
        %v991 = vsub.f32 1.0, %v943
        %v992 = vsub.f32 1.0, %v944
        %v993 = vsub.f32 1.0, %v945
        %v994 = vsub.f32 1.0, %v946
        %v995 = vsub.f32 1.0, %v947
        %v996 = vsub.f32 1.0, %v948
        %v997 = vsub.f32 1.0, %v949
        %v998 = vsub.f32 1.0, %v950
        %v999 = vsub.f32 1.0, %v951
        %v1000 = vsub.f32 1.0, %v952
        %v1001 = vsub.f32 1.0, %v953
        %v1002 = vsub.f32 1.0, %v954
        %v1003 = vsub.f32 1.0, %v955
        %v1004 = vsub.f32 1.0, %v956
        %v1005 = vsub.f32 1.0, %v957
        %v1006 = vsub.f32 1.0, %v958
        %v1007 = vsub.f32 1.0, %v959
        %v1008 = vsub.f32 1.0, %v960
        %v1009 = vsub.f32 1.0, %v961
        %v1010 = vsub.f32 1.0, %v962
        %v1011 = vsub.f32 1.0, %v963
        %v1012 = vsub.f32 1.0, %v964
        %v1013 = vsub.f32 1.0, %v965
        %v1014 = vsub.f32 1.0, %v966
        %v1015 = vsub.f32 1.0, %v967
        %v1016 = vsub.f32 1.0, %v968
        %v1017 = vsub.f32 1.0, %v969
        %v1018 = vsub.f32 1.0, %v970
        %v1019 = vsub.f32 1.0, %v971
        %v1020 = vsub.f32 1.0, %v972
        %v1021 = vsub.f32 1.0, %v973
        %v1022 = vsub.f32 1.0, %v974
        %v1023 = vsub.f32 1.0, %v975
        %v1024 = vsub.f32 1.0, %v976
        %v1025 = vsub.f32 1.0, %v977
        %v1026 = vsub.f32 1.0, %v978
        %v1027 = vsub.f32 1.0, %v979
        %v1028 = vsub.f32 1.0, %v980
        %v1029 = vmul.f32 %v261, %v981
        %v1030 = vmul.f32 %v262, %v982
        %v1031 = vmul.f32 %v263, %v983
        %v1032 = vmul.f32 %v264, %v984
        %v1033 = vmul.f32 %v265, %v985
        %v1034 = vmul.f32 %v266, %v986
        %v1035 = vmul.f32 %v267, %v987
        %v1036 = vmul.f32 %v268, %v988
        %v1037 = vmul.f32 %v269, %v989
        %v1038 = vmul.f32 %v270, %v990
        %v1039 = vmul.f32 %v271, %v991
        %v1040 = vmul.f32 %v272, %v992
        %v1041 = vmul.f32 %v273, %v993
        %v1042 = vmul.f32 %v274, %v994
        %v1043 = vmul.f32 %v275, %v995
        %v1044 = vmul.f32 %v276, %v996
        %v1045 = vmul.f32 %v277, %v997
        %v1046 = vmul.f32 %v278, %v998
        %v1047 = vmul.f32 %v279, %v999
        %v1048 = vmul.f32 %v280, %v1000
        %v1049 = vmul.f32 %v281, %v1001
        %v1050 = vmul.f32 %v282, %v1002
        %v1051 = vmul.f32 %v283, %v1003
        %v1052 = vmul.f32 %v284, %v1004
        %v1053 = vmul.f32 %v285, %v1005
        %v1054 = vmul.f32 %v286, %v1006
        %v1055 = vmul.f32 %v287, %v1007
        %v1056 = vmul.f32 %v288, %v1008
        %v1057 = vmul.f32 %v289, %v1009
        %v1058 = vmul.f32 %v290, %v1010
        %v1059 = vmul.f32 %v291, %v1011
        %v1060 = vmul.f32 %v292, %v1012
        %v1061 = vmul.f32 %v293, %v1013
        %v1062 = vmul.f32 %v294, %v1014
        %v1063 = vmul.f32 %v295, %v1015
        %v1064 = vmul.f32 %v296, %v1016
        %v1065 = vmul.f32 %v297, %v1017
        %v1066 = vmul.f32 %v298, %v1018
        %v1067 = vmul.f32 %v299, %v1019
        %v1068 = vmul.f32 %v300, %v1020
        %v1069 = vmul.f32 %v301, %v1021
        %v1070 = vmul.f32 %v302, %v1022
        %v1071 = vmul.f32 %v303, %v1023
        %v1072 = vmul.f32 %v304, %v1024
        %v1073 = vmul.f32 %v305, %v1025
        %v1074 = vmul.f32 %v306, %v1026
        %v1075 = vmul.f32 %v307, %v1027
        %v1076 = vmul.f32 %v308, %v1028
        %vm1077 = vcmp.eq.f32.partialorder %v549, 0.0
        %vm1078 = vcmp.eq.f32.partialorder %v550, 0.0
        %vm1079 = vcmp.eq.f32.partialorder %v551, 0.0
        %vm1080 = vcmp.eq.f32.partialorder %v552, 0.0
        %vm1081 = vcmp.eq.f32.partialorder %v553, 0.0
        %vm1082 = vcmp.eq.f32.partialorder %v554, 0.0
        %vm1083 = vcmp.eq.f32.partialorder %v555, 0.0
        %vm1084 = vcmp.eq.f32.partialorder %v556, 0.0
        %vm1085 = vcmp.eq.f32.partialorder %v557, 0.0
        %vm1086 = vcmp.eq.f32.partialorder %v558, 0.0
        %vm1087 = vcmp.eq.f32.partialorder %v559, 0.0
        %vm1088 = vcmp.eq.f32.partialorder %v560, 0.0
        %vm1089 = vcmp.eq.f32.partialorder %v561, 0.0
        %vm1090 = vcmp.eq.f32.partialorder %v562, 0.0
        %vm1091 = vcmp.eq.f32.partialorder %v563, 0.0
        %vm1092 = vcmp.eq.f32.partialorder %v564, 0.0
        %vm1093 = vcmp.eq.f32.partialorder %v565, 0.0
        %vm1094 = vcmp.eq.f32.partialorder %v566, 0.0
        %vm1095 = vcmp.eq.f32.partialorder %v567, 0.0
        %vm1096 = vcmp.eq.f32.partialorder %v568, 0.0
        %vm1097 = vcmp.eq.f32.partialorder %v569, 0.0
        %vm1098 = vcmp.eq.f32.partialorder %v570, 0.0
        %vm1099 = vcmp.eq.f32.partialorder %v571, 0.0
        %vm1100 = vcmp.eq.f32.partialorder %v572, 0.0
        %vm1101 = vcmp.eq.f32.partialorder %v573, 0.0
        %vm1102 = vcmp.eq.f32.partialorder %v574, 0.0
        %vm1103 = vcmp.eq.f32.partialorder %v575, 0.0
        %vm1104 = vcmp.eq.f32.partialorder %v576, 0.0
        %vm1105 = vcmp.eq.f32.partialorder %v577, 0.0
        %vm1106 = vcmp.eq.f32.partialorder %v578, 0.0
        %vm1107 = vcmp.eq.f32.partialorder %v579, 0.0
        %vm1108 = vcmp.eq.f32.partialorder %v580, 0.0
        %vm1109 = vcmp.eq.f32.partialorder %v581, 0.0
        %vm1110 = vcmp.eq.f32.partialorder %v582, 0.0
        %vm1111 = vcmp.eq.f32.partialorder %v583, 0.0
        %vm1112 = vcmp.eq.f32.partialorder %v584, 0.0
        %vm1113 = vcmp.eq.f32.partialorder %v585, 0.0
        %vm1114 = vcmp.eq.f32.partialorder %v586, 0.0
        %vm1115 = vcmp.eq.f32.partialorder %v587, 0.0
        %vm1116 = vcmp.eq.f32.partialorder %v588, 0.0
        %vm1117 = vcmp.eq.f32.partialorder %v589, 0.0
        %vm1118 = vcmp.eq.f32.partialorder %v590, 0.0
        %vm1119 = vcmp.eq.f32.partialorder %v591, 0.0
        %vm1120 = vcmp.eq.f32.partialorder %v592, 0.0
        %vm1121 = vcmp.eq.f32.partialorder %v593, 0.0
        %vm1122 = vcmp.eq.f32.partialorder %v594, 0.0
        %vm1123 = vcmp.eq.f32.partialorder %v595, 0.0
        %vm1124 = vcmp.eq.f32.partialorder %v596, 0.0
        %vm1125 = vcmp.eq.f32.partialorder %v549, 1.0
        %vm1126 = vcmp.eq.f32.partialorder %v550, 1.0
        %vm1127 = vcmp.eq.f32.partialorder %v551, 1.0
        %vm1128 = vcmp.eq.f32.partialorder %v552, 1.0
        %vm1129 = vcmp.eq.f32.partialorder %v553, 1.0
        %vm1130 = vcmp.eq.f32.partialorder %v554, 1.0
        %vm1131 = vcmp.eq.f32.partialorder %v555, 1.0
        %vm1132 = vcmp.eq.f32.partialorder %v556, 1.0
        %vm1133 = vcmp.eq.f32.partialorder %v557, 1.0
        %vm1134 = vcmp.eq.f32.partialorder %v558, 1.0
        %vm1135 = vcmp.eq.f32.partialorder %v559, 1.0
        %vm1136 = vcmp.eq.f32.partialorder %v560, 1.0
        %vm1137 = vcmp.eq.f32.partialorder %v561, 1.0
        %vm1138 = vcmp.eq.f32.partialorder %v562, 1.0
        %vm1139 = vcmp.eq.f32.partialorder %v563, 1.0
        %vm1140 = vcmp.eq.f32.partialorder %v564, 1.0
        %vm1141 = vcmp.eq.f32.partialorder %v565, 1.0
        %vm1142 = vcmp.eq.f32.partialorder %v566, 1.0
        %vm1143 = vcmp.eq.f32.partialorder %v567, 1.0
        %vm1144 = vcmp.eq.f32.partialorder %v568, 1.0
        %vm1145 = vcmp.eq.f32.partialorder %v569, 1.0
        %vm1146 = vcmp.eq.f32.partialorder %v570, 1.0
        %vm1147 = vcmp.eq.f32.partialorder %v571, 1.0
        %vm1148 = vcmp.eq.f32.partialorder %v572, 1.0
        %vm1149 = vcmp.eq.f32.partialorder %v573, 1.0
        %vm1150 = vcmp.eq.f32.partialorder %v574, 1.0
        %vm1151 = vcmp.eq.f32.partialorder %v575, 1.0
        %vm1152 = vcmp.eq.f32.partialorder %v576, 1.0
        %vm1153 = vcmp.eq.f32.partialorder %v577, 1.0
        %vm1154 = vcmp.eq.f32.partialorder %v578, 1.0
        %vm1155 = vcmp.eq.f32.partialorder %v579, 1.0
        %vm1156 = vcmp.eq.f32.partialorder %v580, 1.0
        %vm1157 = vcmp.eq.f32.partialorder %v581, 1.0
        %vm1158 = vcmp.eq.f32.partialorder %v582, 1.0
        %vm1159 = vcmp.eq.f32.partialorder %v583, 1.0
        %vm1160 = vcmp.eq.f32.partialorder %v584, 1.0
        %vm1161 = vcmp.eq.f32.partialorder %v585, 1.0
        %vm1162 = vcmp.eq.f32.partialorder %v586, 1.0
        %vm1163 = vcmp.eq.f32.partialorder %v587, 1.0
        %vm1164 = vcmp.eq.f32.partialorder %v588, 1.0
        %vm1165 = vcmp.eq.f32.partialorder %v589, 1.0
        %vm1166 = vcmp.eq.f32.partialorder %v590, 1.0
        %vm1167 = vcmp.eq.f32.partialorder %v591, 1.0
        %vm1168 = vcmp.eq.f32.partialorder %v592, 1.0
        %vm1169 = vcmp.eq.f32.partialorder %v593, 1.0
        %vm1170 = vcmp.eq.f32.partialorder %v594, 1.0
        %vm1171 = vcmp.eq.f32.partialorder %v595, 1.0
        %vm1172 = vcmp.eq.f32.partialorder %v596, 1.0
        %vm1173 = vcmp.eq.f32.partialorder %v549, 2.0
        %vm1174 = vcmp.eq.f32.partialorder %v550, 2.0
        %vm1175 = vcmp.eq.f32.partialorder %v551, 2.0
        %vm1176 = vcmp.eq.f32.partialorder %v552, 2.0
        %vm1177 = vcmp.eq.f32.partialorder %v553, 2.0
        %vm1178 = vcmp.eq.f32.partialorder %v554, 2.0
        %vm1179 = vcmp.eq.f32.partialorder %v555, 2.0
        %vm1180 = vcmp.eq.f32.partialorder %v556, 2.0
        %vm1181 = vcmp.eq.f32.partialorder %v557, 2.0
        %vm1182 = vcmp.eq.f32.partialorder %v558, 2.0
        %vm1183 = vcmp.eq.f32.partialorder %v559, 2.0
        %vm1184 = vcmp.eq.f32.partialorder %v560, 2.0
        %vm1185 = vcmp.eq.f32.partialorder %v561, 2.0
        %vm1186 = vcmp.eq.f32.partialorder %v562, 2.0
        %vm1187 = vcmp.eq.f32.partialorder %v563, 2.0
        %vm1188 = vcmp.eq.f32.partialorder %v564, 2.0
        %vm1189 = vcmp.eq.f32.partialorder %v565, 2.0
        %vm1190 = vcmp.eq.f32.partialorder %v566, 2.0
        %vm1191 = vcmp.eq.f32.partialorder %v567, 2.0
        %vm1192 = vcmp.eq.f32.partialorder %v568, 2.0
        %vm1193 = vcmp.eq.f32.partialorder %v569, 2.0
        %vm1194 = vcmp.eq.f32.partialorder %v570, 2.0
        %vm1195 = vcmp.eq.f32.partialorder %v571, 2.0
        %vm1196 = vcmp.eq.f32.partialorder %v572, 2.0
        %vm1197 = vcmp.eq.f32.partialorder %v573, 2.0
        %vm1198 = vcmp.eq.f32.partialorder %v574, 2.0
        %vm1199 = vcmp.eq.f32.partialorder %v575, 2.0
        %vm1200 = vcmp.eq.f32.partialorder %v576, 2.0
        %vm1201 = vcmp.eq.f32.partialorder %v577, 2.0
        %vm1202 = vcmp.eq.f32.partialorder %v578, 2.0
        %vm1203 = vcmp.eq.f32.partialorder %v579, 2.0
        %vm1204 = vcmp.eq.f32.partialorder %v580, 2.0
        %vm1205 = vcmp.eq.f32.partialorder %v581, 2.0
        %vm1206 = vcmp.eq.f32.partialorder %v582, 2.0
        %vm1207 = vcmp.eq.f32.partialorder %v583, 2.0
        %vm1208 = vcmp.eq.f32.partialorder %v584, 2.0
        %vm1209 = vcmp.eq.f32.partialorder %v585, 2.0
        %vm1210 = vcmp.eq.f32.partialorder %v586, 2.0
        %vm1211 = vcmp.eq.f32.partialorder %v587, 2.0
        %vm1212 = vcmp.eq.f32.partialorder %v588, 2.0
        %vm1213 = vcmp.eq.f32.partialorder %v589, 2.0
        %vm1214 = vcmp.eq.f32.partialorder %v590, 2.0
        %vm1215 = vcmp.eq.f32.partialorder %v591, 2.0
        %vm1216 = vcmp.eq.f32.partialorder %v592, 2.0
        %vm1217 = vcmp.eq.f32.partialorder %v593, 2.0
        %vm1218 = vcmp.eq.f32.partialorder %v594, 2.0
        %vm1219 = vcmp.eq.f32.partialorder %v595, 2.0
        %vm1220 = vcmp.eq.f32.partialorder %v596, 2.0
        %vm1221 = vcmp.eq.f32.partialorder %v549, 3.0
        %vm1222 = vcmp.eq.f32.partialorder %v550, 3.0
        %vm1223 = vcmp.eq.f32.partialorder %v551, 3.0
        %vm1224 = vcmp.eq.f32.partialorder %v552, 3.0
        %vm1225 = vcmp.eq.f32.partialorder %v553, 3.0
        %vm1226 = vcmp.eq.f32.partialorder %v554, 3.0
        %vm1227 = vcmp.eq.f32.partialorder %v555, 3.0
        %vm1228 = vcmp.eq.f32.partialorder %v556, 3.0
        %vm1229 = vcmp.eq.f32.partialorder %v557, 3.0
        %vm1230 = vcmp.eq.f32.partialorder %v558, 3.0
        %vm1231 = vcmp.eq.f32.partialorder %v559, 3.0
        %vm1232 = vcmp.eq.f32.partialorder %v560, 3.0
        %vm1233 = vcmp.eq.f32.partialorder %v561, 3.0
        %vm1234 = vcmp.eq.f32.partialorder %v562, 3.0
        %vm1235 = vcmp.eq.f32.partialorder %v563, 3.0
        %vm1236 = vcmp.eq.f32.partialorder %v564, 3.0
        %vm1237 = vcmp.eq.f32.partialorder %v565, 3.0
        %vm1238 = vcmp.eq.f32.partialorder %v566, 3.0
        %vm1239 = vcmp.eq.f32.partialorder %v567, 3.0
        %vm1240 = vcmp.eq.f32.partialorder %v568, 3.0
        %vm1241 = vcmp.eq.f32.partialorder %v569, 3.0
        %vm1242 = vcmp.eq.f32.partialorder %v570, 3.0
        %vm1243 = vcmp.eq.f32.partialorder %v571, 3.0
        %vm1244 = vcmp.eq.f32.partialorder %v572, 3.0
        %vm1245 = vcmp.eq.f32.partialorder %v573, 3.0
        %vm1246 = vcmp.eq.f32.partialorder %v574, 3.0
        %vm1247 = vcmp.eq.f32.partialorder %v575, 3.0
        %vm1248 = vcmp.eq.f32.partialorder %v576, 3.0
        %vm1249 = vcmp.eq.f32.partialorder %v577, 3.0
        %vm1250 = vcmp.eq.f32.partialorder %v578, 3.0
        %vm1251 = vcmp.eq.f32.partialorder %v579, 3.0
        %vm1252 = vcmp.eq.f32.partialorder %v580, 3.0
        %vm1253 = vcmp.eq.f32.partialorder %v581, 3.0
        %vm1254 = vcmp.eq.f32.partialorder %v582, 3.0
        %vm1255 = vcmp.eq.f32.partialorder %v583, 3.0
        %vm1256 = vcmp.eq.f32.partialorder %v584, 3.0
        %vm1257 = vcmp.eq.f32.partialorder %v585, 3.0
        %vm1258 = vcmp.eq.f32.partialorder %v586, 3.0
        %vm1259 = vcmp.eq.f32.partialorder %v587, 3.0
        %vm1260 = vcmp.eq.f32.partialorder %v588, 3.0
        %vm1261 = vcmp.eq.f32.partialorder %v589, 3.0
        %vm1262 = vcmp.eq.f32.partialorder %v590, 3.0
        %vm1263 = vcmp.eq.f32.partialorder %v591, 3.0
        %vm1264 = vcmp.eq.f32.partialorder %v592, 3.0
        %vm1265 = vcmp.eq.f32.partialorder %v593, 3.0
        %vm1266 = vcmp.eq.f32.partialorder %v594, 3.0
        %vm1267 = vcmp.eq.f32.partialorder %v595, 3.0
        %vm1268 = vcmp.eq.f32.partialorder %v596, 3.0
        %vm1269 = vcmp.eq.f32.partialorder %v549, 4.0
        %vm1270 = vcmp.eq.f32.partialorder %v550, 4.0
        %vm1271 = vcmp.eq.f32.partialorder %v551, 4.0
        %vm1272 = vcmp.eq.f32.partialorder %v552, 4.0
        %vm1273 = vcmp.eq.f32.partialorder %v553, 4.0
        %vm1274 = vcmp.eq.f32.partialorder %v554, 4.0
        %vm1275 = vcmp.eq.f32.partialorder %v555, 4.0
        %vm1276 = vcmp.eq.f32.partialorder %v556, 4.0
        %vm1277 = vcmp.eq.f32.partialorder %v557, 4.0
        %vm1278 = vcmp.eq.f32.partialorder %v558, 4.0
        %vm1279 = vcmp.eq.f32.partialorder %v559, 4.0
        %vm1280 = vcmp.eq.f32.partialorder %v560, 4.0
        %vm1281 = vcmp.eq.f32.partialorder %v561, 4.0
        %vm1282 = vcmp.eq.f32.partialorder %v562, 4.0
        %vm1283 = vcmp.eq.f32.partialorder %v563, 4.0
        %vm1284 = vcmp.eq.f32.partialorder %v564, 4.0
        %vm1285 = vcmp.eq.f32.partialorder %v565, 4.0
        %vm1286 = vcmp.eq.f32.partialorder %v566, 4.0
        %vm1287 = vcmp.eq.f32.partialorder %v567, 4.0
        %vm1288 = vcmp.eq.f32.partialorder %v568, 4.0
        %vm1289 = vcmp.eq.f32.partialorder %v569, 4.0
        %vm1290 = vcmp.eq.f32.partialorder %v570, 4.0
        %vm1291 = vcmp.eq.f32.partialorder %v571, 4.0
        %vm1292 = vcmp.eq.f32.partialorder %v572, 4.0
        %vm1293 = vcmp.eq.f32.partialorder %v573, 4.0
        %vm1294 = vcmp.eq.f32.partialorder %v574, 4.0
        %vm1295 = vcmp.eq.f32.partialorder %v575, 4.0
        %vm1296 = vcmp.eq.f32.partialorder %v576, 4.0
        %vm1297 = vcmp.eq.f32.partialorder %v577, 4.0
        %vm1298 = vcmp.eq.f32.partialorder %v578, 4.0
        %vm1299 = vcmp.eq.f32.partialorder %v579, 4.0
        %vm1300 = vcmp.eq.f32.partialorder %v580, 4.0
        %vm1301 = vcmp.eq.f32.partialorder %v581, 4.0
        %vm1302 = vcmp.eq.f32.partialorder %v582, 4.0
        %vm1303 = vcmp.eq.f32.partialorder %v583, 4.0
        %vm1304 = vcmp.eq.f32.partialorder %v584, 4.0
        %vm1305 = vcmp.eq.f32.partialorder %v585, 4.0
        %vm1306 = vcmp.eq.f32.partialorder %v586, 4.0
        %vm1307 = vcmp.eq.f32.partialorder %v587, 4.0
        %vm1308 = vcmp.eq.f32.partialorder %v588, 4.0
        %vm1309 = vcmp.eq.f32.partialorder %v589, 4.0
        %vm1310 = vcmp.eq.f32.partialorder %v590, 4.0
        %vm1311 = vcmp.eq.f32.partialorder %v591, 4.0
        %vm1312 = vcmp.eq.f32.partialorder %v592, 4.0
        %vm1313 = vcmp.eq.f32.partialorder %v593, 4.0
        %vm1314 = vcmp.eq.f32.partialorder %v594, 4.0
        %vm1315 = vcmp.eq.f32.partialorder %v595, 4.0
        %vm1316 = vcmp.eq.f32.partialorder %v596, 4.0
        %vm1317 = vmor %vm1173, %vm1221
        %vm1318 = vmor %vm1174, %vm1222
        %vm1319 = vmor %vm1175, %vm1223
        %vm1320 = vmor %vm1176, %vm1224
        %vm1321 = vmor %vm1177, %vm1225
        %vm1322 = vmor %vm1178, %vm1226
        %vm1323 = vmor %vm1179, %vm1227
        %vm1324 = vmor %vm1180, %vm1228
        %vm1325 = vmor %vm1181, %vm1229
        %vm1326 = vmor %vm1182, %vm1230
        %vm1327 = vmor %vm1183, %vm1231
        %vm1328 = vmor %vm1184, %vm1232
        %vm1329 = vmor %vm1185, %vm1233
        %vm1330 = vmor %vm1186, %vm1234
        %vm1331 = vmor %vm1187, %vm1235
        %vm1332 = vmor %vm1188, %vm1236
        %vm1333 = vmor %vm1189, %vm1237
        %vm1334 = vmor %vm1190, %vm1238
        %vm1335 = vmor %vm1191, %vm1239
        %vm1336 = vmor %vm1192, %vm1240
        %vm1337 = vmor %vm1193, %vm1241
        %vm1338 = vmor %vm1194, %vm1242
        %vm1339 = vmor %vm1195, %vm1243
        %vm1340 = vmor %vm1196, %vm1244
        %vm1341 = vmor %vm1197, %vm1245
        %vm1342 = vmor %vm1198, %vm1246
        %vm1343 = vmor %vm1199, %vm1247
        %vm1344 = vmor %vm1200, %vm1248
        %vm1345 = vmor %vm1201, %vm1249
        %vm1346 = vmor %vm1202, %vm1250
        %vm1347 = vmor %vm1203, %vm1251
        %vm1348 = vmor %vm1204, %vm1252
        %vm1349 = vmor %vm1205, %vm1253
        %vm1350 = vmor %vm1206, %vm1254
        %vm1351 = vmor %vm1207, %vm1255
        %vm1352 = vmor %vm1208, %vm1256
        %vm1353 = vmor %vm1209, %vm1257
        %vm1354 = vmor %vm1210, %vm1258
        %vm1355 = vmor %vm1211, %vm1259
        %vm1356 = vmor %vm1212, %vm1260
        %vm1357 = vmor %vm1213, %vm1261
        %vm1358 = vmor %vm1214, %vm1262
        %vm1359 = vmor %vm1215, %vm1263
        %vm1360 = vmor %vm1216, %vm1264
        %vm1361 = vmor %vm1217, %vm1265
        %vm1362 = vmor %vm1218, %vm1266
        %vm1363 = vmor %vm1219, %vm1267
        %vm1364 = vmor %vm1220, %vm1268
        %v1365 = vsel %vm1269, %v1029, %v261
        %v1366 = vsel %vm1270, %v1030, %v262
        %v1367 = vsel %vm1271, %v1031, %v263
        %v1368 = vsel %vm1272, %v1032, %v264
        %v1369 = vsel %vm1273, %v1033, %v265
        %v1370 = vsel %vm1274, %v1034, %v266
        %v1371 = vsel %vm1275, %v1035, %v267
        %v1372 = vsel %vm1276, %v1036, %v268
        %v1373 = vsel %vm1277, %v1037, %v269
        %v1374 = vsel %vm1278, %v1038, %v270
        %v1375 = vsel %vm1279, %v1039, %v271
        %v1376 = vsel %vm1280, %v1040, %v272
        %v1377 = vsel %vm1281, %v1041, %v273
        %v1378 = vsel %vm1282, %v1042, %v274
        %v1379 = vsel %vm1283, %v1043, %v275
        %v1380 = vsel %vm1284, %v1044, %v276
        %v1381 = vsel %vm1285, %v1045, %v277
        %v1382 = vsel %vm1286, %v1046, %v278
        %v1383 = vsel %vm1287, %v1047, %v279
        %v1384 = vsel %vm1288, %v1048, %v280
        %v1385 = vsel %vm1289, %v1049, %v281
        %v1386 = vsel %vm1290, %v1050, %v282
        %v1387 = vsel %vm1291, %v1051, %v283
        %v1388 = vsel %vm1292, %v1052, %v284
        %v1389 = vsel %vm1293, %v1053, %v285
        %v1390 = vsel %vm1294, %v1054, %v286
        %v1391 = vsel %vm1295, %v1055, %v287
        %v1392 = vsel %vm1296, %v1056, %v288
        %v1393 = vsel %vm1297, %v1057, %v289
        %v1394 = vsel %vm1298, %v1058, %v290
        %v1395 = vsel %vm1299, %v1059, %v291
        %v1396 = vsel %vm1300, %v1060, %v292
        %v1397 = vsel %vm1301, %v1061, %v293
        %v1398 = vsel %vm1302, %v1062, %v294
        %v1399 = vsel %vm1303, %v1063, %v295
        %v1400 = vsel %vm1304, %v1064, %v296
        %v1401 = vsel %vm1305, %v1065, %v297
        %v1402 = vsel %vm1306, %v1066, %v298
        %v1403 = vsel %vm1307, %v1067, %v299
        %v1404 = vsel %vm1308, %v1068, %v300
        %v1405 = vsel %vm1309, %v1069, %v301
        %v1406 = vsel %vm1310, %v1070, %v302
        %v1407 = vsel %vm1311, %v1071, %v303
        %v1408 = vsel %vm1312, %v1072, %v304
        %v1409 = vsel %vm1313, %v1073, %v305
        %v1410 = vsel %vm1314, %v1074, %v306
        %v1411 = vsel %vm1315, %v1075, %v307
        %v1412 = vsel %vm1316, %v1076, %v308
        %v1413 = vsel %vm1317, %v693, %v1365
        %v1414 = vsel %vm1318, %v694, %v1366
        %v1415 = vsel %vm1319, %v695, %v1367
        %v1416 = vsel %vm1320, %v696, %v1368
        %v1417 = vsel %vm1321, %v697, %v1369
        %v1418 = vsel %vm1322, %v698, %v1370
        %v1419 = vsel %vm1323, %v699, %v1371
        %v1420 = vsel %vm1324, %v700, %v1372
        %v1421 = vsel %vm1325, %v701, %v1373
        %v1422 = vsel %vm1326, %v702, %v1374
        %v1423 = vsel %vm1327, %v703, %v1375
        %v1424 = vsel %vm1328, %v704, %v1376
        %v1425 = vsel %vm1329, %v705, %v1377
        %v1426 = vsel %vm1330, %v706, %v1378
        %v1427 = vsel %vm1331, %v707, %v1379
        %v1428 = vsel %vm1332, %v708, %v1380
        %v1429 = vsel %vm1333, %v709, %v1381
        %v1430 = vsel %vm1334, %v710, %v1382
        %v1431 = vsel %vm1335, %v711, %v1383
        %v1432 = vsel %vm1336, %v712, %v1384
        %v1433 = vsel %vm1337, %v713, %v1385
        %v1434 = vsel %vm1338, %v714, %v1386
        %v1435 = vsel %vm1339, %v715, %v1387
        %v1436 = vsel %vm1340, %v716, %v1388
        %v1437 = vsel %vm1341, %v717, %v1389
        %v1438 = vsel %vm1342, %v718, %v1390
        %v1439 = vsel %vm1343, %v719, %v1391
        %v1440 = vsel %vm1344, %v720, %v1392
        %v1441 = vsel %vm1345, %v721, %v1393
        %v1442 = vsel %vm1346, %v722, %v1394
        %v1443 = vsel %vm1347, %v723, %v1395
        %v1444 = vsel %vm1348, %v724, %v1396
        %v1445 = vsel %vm1349, %v725, %v1397
        %v1446 = vsel %vm1350, %v726, %v1398
        %v1447 = vsel %vm1351, %v727, %v1399
        %v1448 = vsel %vm1352, %v728, %v1400
        %v1449 = vsel %vm1353, %v729, %v1401
        %v1450 = vsel %vm1354, %v730, %v1402
        %v1451 = vsel %vm1355, %v731, %v1403
        %v1452 = vsel %vm1356, %v732, %v1404
        %v1453 = vsel %vm1357, %v733, %v1405
        %v1454 = vsel %vm1358, %v734, %v1406
        %v1455 = vsel %vm1359, %v735, %v1407
        %v1456 = vsel %vm1360, %v736, %v1408
        %v1457 = vsel %vm1361, %v737, %v1409
        %v1458 = vsel %vm1362, %v738, %v1410
        %v1459 = vsel %vm1363, %v739, %v1411
        %v1460 = vsel %vm1364, %v740, %v1412
        %v1461 = vsel %vm1125, %v837, %v1413
        %v1462 = vsel %vm1126, %v838, %v1414
        %v1463 = vsel %vm1127, %v839, %v1415
        %v1464 = vsel %vm1128, %v840, %v1416
        %v1465 = vsel %vm1129, %v841, %v1417
        %v1466 = vsel %vm1130, %v842, %v1418
        %v1467 = vsel %vm1131, %v843, %v1419
        %v1468 = vsel %vm1132, %v844, %v1420
        %v1469 = vsel %vm1133, %v845, %v1421
        %v1470 = vsel %vm1134, %v846, %v1422
        %v1471 = vsel %vm1135, %v847, %v1423
        %v1472 = vsel %vm1136, %v848, %v1424
        %v1473 = vsel %vm1137, %v849, %v1425
        %v1474 = vsel %vm1138, %v850, %v1426
        %v1475 = vsel %vm1139, %v851, %v1427
        %v1476 = vsel %vm1140, %v852, %v1428
        %v1477 = vsel %vm1141, %v853, %v1429
        %v1478 = vsel %vm1142, %v854, %v1430
        %v1479 = vsel %vm1143, %v855, %v1431
        %v1480 = vsel %vm1144, %v856, %v1432
        %v1481 = vsel %vm1145, %v857, %v1433
        %v1482 = vsel %vm1146, %v858, %v1434
        %v1483 = vsel %vm1147, %v859, %v1435
        %v1484 = vsel %vm1148, %v860, %v1436
        %v1485 = vsel %vm1149, %v861, %v1437
        %v1486 = vsel %vm1150, %v862, %v1438
        %v1487 = vsel %vm1151, %v863, %v1439
        %v1488 = vsel %vm1152, %v864, %v1440
        %v1489 = vsel %vm1153, %v865, %v1441
        %v1490 = vsel %vm1154, %v866, %v1442
        %v1491 = vsel %vm1155, %v867, %v1443
        %v1492 = vsel %vm1156, %v868, %v1444
        %v1493 = vsel %vm1157, %v869, %v1445
        %v1494 = vsel %vm1158, %v870, %v1446
        %v1495 = vsel %vm1159, %v871, %v1447
        %v1496 = vsel %vm1160, %v872, %v1448
        %v1497 = vsel %vm1161, %v873, %v1449
        %v1498 = vsel %vm1162, %v874, %v1450
        %v1499 = vsel %vm1163, %v875, %v1451
        %v1500 = vsel %vm1164, %v876, %v1452
        %v1501 = vsel %vm1165, %v877, %v1453
        %v1502 = vsel %vm1166, %v878, %v1454
        %v1503 = vsel %vm1167, %v879, %v1455
        %v1504 = vsel %vm1168, %v880, %v1456
        %v1505 = vsel %vm1169, %v881, %v1457
        %v1506 = vsel %vm1170, %v882, %v1458
        %v1507 = vsel %vm1171, %v883, %v1459
        %v1508 = vsel %vm1172, %v884, %v1460
        %v1509 = vsel %vm1077, %v261, %v1461
        %v1510 = vsel %vm1078, %v262, %v1462
        %v1511 = vsel %vm1079, %v263, %v1463
        %v1512 = vsel %vm1080, %v264, %v1464
        %v1513 = vsel %vm1081, %v265, %v1465
        %v1514 = vsel %vm1082, %v266, %v1466
        %v1515 = vsel %vm1083, %v267, %v1467
        %v1516 = vsel %vm1084, %v268, %v1468
        %v1517 = vsel %vm1085, %v269, %v1469
        %v1518 = vsel %vm1086, %v270, %v1470
        %v1519 = vsel %vm1087, %v271, %v1471
        %v1520 = vsel %vm1088, %v272, %v1472
        %v1521 = vsel %vm1089, %v273, %v1473
        %v1522 = vsel %vm1090, %v274, %v1474
        %v1523 = vsel %vm1091, %v275, %v1475
        %v1524 = vsel %vm1092, %v276, %v1476
        %v1525 = vsel %vm1093, %v277, %v1477
        %v1526 = vsel %vm1094, %v278, %v1478
        %v1527 = vsel %vm1095, %v279, %v1479
        %v1528 = vsel %vm1096, %v280, %v1480
        %v1529 = vsel %vm1097, %v281, %v1481
        %v1530 = vsel %vm1098, %v282, %v1482
        %v1531 = vsel %vm1099, %v283, %v1483
        %v1532 = vsel %vm1100, %v284, %v1484
        %v1533 = vsel %vm1101, %v285, %v1485
        %v1534 = vsel %vm1102, %v286, %v1486
        %v1535 = vsel %vm1103, %v287, %v1487
        %v1536 = vsel %vm1104, %v288, %v1488
        %v1537 = vsel %vm1105, %v289, %v1489
        %v1538 = vsel %vm1106, %v290, %v1490
        %v1539 = vsel %vm1107, %v291, %v1491
        %v1540 = vsel %vm1108, %v292, %v1492
        %v1541 = vsel %vm1109, %v293, %v1493
        %v1542 = vsel %vm1110, %v294, %v1494
        %v1543 = vsel %vm1111, %v295, %v1495
        %v1544 = vsel %vm1112, %v296, %v1496
        %v1545 = vsel %vm1113, %v297, %v1497
        %v1546 = vsel %vm1114, %v298, %v1498
        %v1547 = vsel %vm1115, %v299, %v1499
        %v1548 = vsel %vm1116, %v300, %v1500
        %v1549 = vsel %vm1117, %v301, %v1501
        %v1550 = vsel %vm1118, %v302, %v1502
        %v1551 = vsel %vm1119, %v303, %v1503
        %v1552 = vsel %vm1120, %v304, %v1504
        %v1553 = vsel %vm1121, %v305, %v1505
        %v1554 = vsel %vm1122, %v306, %v1506
        %v1555 = vsel %vm1123, %v307, %v1507
        %v1556 = vsel %vm1124, %v308, %v1508
        %vm1557 = vmor %vm1125, %vm1173
        %vm1558 = vmor %vm1126, %vm1174
        %vm1559 = vmor %vm1127, %vm1175
        %vm1560 = vmor %vm1128, %vm1176
        %vm1561 = vmor %vm1129, %vm1177
        %vm1562 = vmor %vm1130, %vm1178
        %vm1563 = vmor %vm1131, %vm1179
        %vm1564 = vmor %vm1132, %vm1180
        %vm1565 = vmor %vm1133, %vm1181
        %vm1566 = vmor %vm1134, %vm1182
        %vm1567 = vmor %vm1135, %vm1183
        %vm1568 = vmor %vm1136, %vm1184
        %vm1569 = vmor %vm1137, %vm1185
        %vm1570 = vmor %vm1138, %vm1186
        %vm1571 = vmor %vm1139, %vm1187
        %vm1572 = vmor %vm1140, %vm1188
        %vm1573 = vmor %vm1141, %vm1189
        %vm1574 = vmor %vm1142, %vm1190
        %vm1575 = vmor %vm1143, %vm1191
        %vm1576 = vmor %vm1144, %vm1192
        %vm1577 = vmor %vm1145, %vm1193
        %vm1578 = vmor %vm1146, %vm1194
        %vm1579 = vmor %vm1147, %vm1195
        %vm1580 = vmor %vm1148, %vm1196
        %vm1581 = vmor %vm1149, %vm1197
        %vm1582 = vmor %vm1150, %vm1198
        %vm1583 = vmor %vm1151, %vm1199
        %vm1584 = vmor %vm1152, %vm1200
        %vm1585 = vmor %vm1153, %vm1201
        %vm1586 = vmor %vm1154, %vm1202
        %vm1587 = vmor %vm1155, %vm1203
        %vm1588 = vmor %vm1156, %vm1204
        %vm1589 = vmor %vm1157, %vm1205
        %vm1590 = vmor %vm1158, %vm1206
        %vm1591 = vmor %vm1159, %vm1207
        %vm1592 = vmor %vm1160, %vm1208
        %vm1593 = vmor %vm1161, %vm1209
        %vm1594 = vmor %vm1162, %vm1210
        %vm1595 = vmor %vm1163, %vm1211
        %vm1596 = vmor %vm1164, %vm1212
        %vm1597 = vmor %vm1165, %vm1213
        %vm1598 = vmor %vm1166, %vm1214
        %vm1599 = vmor %vm1167, %vm1215
        %vm1600 = vmor %vm1168, %vm1216
        %vm1601 = vmor %vm1169, %vm1217
        %vm1602 = vmor %vm1170, %vm1218
        %vm1603 = vmor %vm1171, %vm1219
        %vm1604 = vmor %vm1172, %vm1220
        %v1605 = vsel %vm1221, %v837, %v693
        %v1606 = vsel %vm1222, %v838, %v694
        %v1607 = vsel %vm1223, %v839, %v695
        %v1608 = vsel %vm1224, %v840, %v696
        %v1609 = vsel %vm1225, %v841, %v697
        %v1610 = vsel %vm1226, %v842, %v698
        %v1611 = vsel %vm1227, %v843, %v699
        %v1612 = vsel %vm1228, %v844, %v700
        %v1613 = vsel %vm1229, %v845, %v701
        %v1614 = vsel %vm1230, %v846, %v702
        %v1615 = vsel %vm1231, %v847, %v703
        %v1616 = vsel %vm1232, %v848, %v704
        %v1617 = vsel %vm1233, %v849, %v705
        %v1618 = vsel %vm1234, %v850, %v706
        %v1619 = vsel %vm1235, %v851, %v707
        %v1620 = vsel %vm1236, %v852, %v708
        %v1621 = vsel %vm1237, %v853, %v709
        %v1622 = vsel %vm1238, %v854, %v710
        %v1623 = vsel %vm1239, %v855, %v711
        %v1624 = vsel %vm1240, %v856, %v712
        %v1625 = vsel %vm1241, %v857, %v713
        %v1626 = vsel %vm1242, %v858, %v714
        %v1627 = vsel %vm1243, %v859, %v715
        %v1628 = vsel %vm1244, %v860, %v716
        %v1629 = vsel %vm1245, %v861, %v717
        %v1630 = vsel %vm1246, %v862, %v718
        %v1631 = vsel %vm1247, %v863, %v719
        %v1632 = vsel %vm1248, %v864, %v720
        %v1633 = vsel %vm1249, %v865, %v721
        %v1634 = vsel %vm1250, %v866, %v722
        %v1635 = vsel %vm1251, %v867, %v723
        %v1636 = vsel %vm1252, %v868, %v724
        %v1637 = vsel %vm1253, %v869, %v725
        %v1638 = vsel %vm1254, %v870, %v726
        %v1639 = vsel %vm1255, %v871, %v727
        %v1640 = vsel %vm1256, %v872, %v728
        %v1641 = vsel %vm1257, %v873, %v729
        %v1642 = vsel %vm1258, %v874, %v730
        %v1643 = vsel %vm1259, %v875, %v731
        %v1644 = vsel %vm1260, %v876, %v732
        %v1645 = vsel %vm1261, %v877, %v733
        %v1646 = vsel %vm1262, %v878, %v734
        %v1647 = vsel %vm1263, %v879, %v735
        %v1648 = vsel %vm1264, %v880, %v736
        %v1649 = vsel %vm1265, %v881, %v737
        %v1650 = vsel %vm1266, %v882, %v738
        %v1651 = vsel %vm1267, %v883, %v739
        %v1652 = vsel %vm1268, %v884, %v740
        %v1653 = vsel %vm1557, %v261, %v1605
        %v1654 = vsel %vm1558, %v262, %v1606
        %v1655 = vsel %vm1559, %v263, %v1607
        %v1656 = vsel %vm1560, %v264, %v1608
        %v1657 = vsel %vm1561, %v265, %v1609
        %v1658 = vsel %vm1562, %v266, %v1610
        %v1659 = vsel %vm1563, %v267, %v1611
        %v1660 = vsel %vm1564, %v268, %v1612
        %v1661 = vsel %vm1565, %v269, %v1613
        %v1662 = vsel %vm1566, %v270, %v1614
        %v1663 = vsel %vm1567, %v271, %v1615
        %v1664 = vsel %vm1568, %v272, %v1616
        %v1665 = vsel %vm1569, %v273, %v1617
        %v1666 = vsel %vm1570, %v274, %v1618
        %v1667 = vsel %vm1571, %v275, %v1619
        %v1668 = vsel %vm1572, %v276, %v1620
        %v1669 = vsel %vm1573, %v277, %v1621
        %v1670 = vsel %vm1574, %v278, %v1622
        %v1671 = vsel %vm1575, %v279, %v1623
        %v1672 = vsel %vm1576, %v280, %v1624
        %v1673 = vsel %vm1577, %v281, %v1625
        %v1674 = vsel %vm1578, %v282, %v1626
        %v1675 = vsel %vm1579, %v283, %v1627
        %v1676 = vsel %vm1580, %v284, %v1628
        %v1677 = vsel %vm1581, %v285, %v1629
        %v1678 = vsel %vm1582, %v286, %v1630
        %v1679 = vsel %vm1583, %v287, %v1631
        %v1680 = vsel %vm1584, %v288, %v1632
        %v1681 = vsel %vm1585, %v289, %v1633
        %v1682 = vsel %vm1586, %v290, %v1634
        %v1683 = vsel %vm1587, %v291, %v1635
        %v1684 = vsel %vm1588, %v292, %v1636
        %v1685 = vsel %vm1589, %v293, %v1637
        %v1686 = vsel %vm1590, %v294, %v1638
        %v1687 = vsel %vm1591, %v295, %v1639
        %v1688 = vsel %vm1592, %v296, %v1640
        %v1689 = vsel %vm1593, %v297, %v1641
        %v1690 = vsel %vm1594, %v298, %v1642
        %v1691 = vsel %vm1595, %v299, %v1643
        %v1692 = vsel %vm1596, %v300, %v1644
        %v1693 = vsel %vm1597, %v301, %v1645
        %v1694 = vsel %vm1598, %v302, %v1646
        %v1695 = vsel %vm1599, %v303, %v1647
        %v1696 = vsel %vm1600, %v304, %v1648
        %v1697 = vsel %vm1601, %v305, %v1649
        %v1698 = vsel %vm1602, %v306, %v1650
        %v1699 = vsel %vm1603, %v307, %v1651
        %v1700 = vsel %vm1604, %v308, %v1652
        %v1701 = vsel %vm1077, %v1029, %v1653
        %v1702 = vsel %vm1078, %v1030, %v1654
        %v1703 = vsel %vm1079, %v1031, %v1655
        %v1704 = vsel %vm1080, %v1032, %v1656
        %v1705 = vsel %vm1081, %v1033, %v1657
        %v1706 = vsel %vm1082, %v1034, %v1658
        %v1707 = vsel %vm1083, %v1035, %v1659
        %v1708 = vsel %vm1084, %v1036, %v1660
        %v1709 = vsel %vm1085, %v1037, %v1661
        %v1710 = vsel %vm1086, %v1038, %v1662
        %v1711 = vsel %vm1087, %v1039, %v1663
        %v1712 = vsel %vm1088, %v1040, %v1664
        %v1713 = vsel %vm1089, %v1041, %v1665
        %v1714 = vsel %vm1090, %v1042, %v1666
        %v1715 = vsel %vm1091, %v1043, %v1667
        %v1716 = vsel %vm1092, %v1044, %v1668
        %v1717 = vsel %vm1093, %v1045, %v1669
        %v1718 = vsel %vm1094, %v1046, %v1670
        %v1719 = vsel %vm1095, %v1047, %v1671
        %v1720 = vsel %vm1096, %v1048, %v1672
        %v1721 = vsel %vm1097, %v1049, %v1673
        %v1722 = vsel %vm1098, %v1050, %v1674
        %v1723 = vsel %vm1099, %v1051, %v1675
        %v1724 = vsel %vm1100, %v1052, %v1676
        %v1725 = vsel %vm1101, %v1053, %v1677
        %v1726 = vsel %vm1102, %v1054, %v1678
        %v1727 = vsel %vm1103, %v1055, %v1679
        %v1728 = vsel %vm1104, %v1056, %v1680
        %v1729 = vsel %vm1105, %v1057, %v1681
        %v1730 = vsel %vm1106, %v1058, %v1682
        %v1731 = vsel %vm1107, %v1059, %v1683
        %v1732 = vsel %vm1108, %v1060, %v1684
        %v1733 = vsel %vm1109, %v1061, %v1685
        %v1734 = vsel %vm1110, %v1062, %v1686
        %v1735 = vsel %vm1111, %v1063, %v1687
        %v1736 = vsel %vm1112, %v1064, %v1688
        %v1737 = vsel %vm1113, %v1065, %v1689
        %v1738 = vsel %vm1114, %v1066, %v1690
        %v1739 = vsel %vm1115, %v1067, %v1691
        %v1740 = vsel %vm1116, %v1068, %v1692
        %v1741 = vsel %vm1117, %v1069, %v1693
        %v1742 = vsel %vm1118, %v1070, %v1694
        %v1743 = vsel %vm1119, %v1071, %v1695
        %v1744 = vsel %vm1120, %v1072, %v1696
        %v1745 = vsel %vm1121, %v1073, %v1697
        %v1746 = vsel %vm1122, %v1074, %v1698
        %v1747 = vsel %vm1123, %v1075, %v1699
        %v1748 = vsel %vm1124, %v1076, %v1700
        %vm1749 = vmor %vm1077, %vm1125
        %vm1750 = vmor %vm1078, %vm1126
        %vm1751 = vmor %vm1079, %vm1127
        %vm1752 = vmor %vm1080, %vm1128
        %vm1753 = vmor %vm1081, %vm1129
        %vm1754 = vmor %vm1082, %vm1130
        %vm1755 = vmor %vm1083, %vm1131
        %vm1756 = vmor %vm1084, %vm1132
        %vm1757 = vmor %vm1085, %vm1133
        %vm1758 = vmor %vm1086, %vm1134
        %vm1759 = vmor %vm1087, %vm1135
        %vm1760 = vmor %vm1088, %vm1136
        %vm1761 = vmor %vm1089, %vm1137
        %vm1762 = vmor %vm1090, %vm1138
        %vm1763 = vmor %vm1091, %vm1139
        %vm1764 = vmor %vm1092, %vm1140
        %vm1765 = vmor %vm1093, %vm1141
        %vm1766 = vmor %vm1094, %vm1142
        %vm1767 = vmor %vm1095, %vm1143
        %vm1768 = vmor %vm1096, %vm1144
        %vm1769 = vmor %vm1097, %vm1145
        %vm1770 = vmor %vm1098, %vm1146
        %vm1771 = vmor %vm1099, %vm1147
        %vm1772 = vmor %vm1100, %vm1148
        %vm1773 = vmor %vm1101, %vm1149
        %vm1774 = vmor %vm1102, %vm1150
        %vm1775 = vmor %vm1103, %vm1151
        %vm1776 = vmor %vm1104, %vm1152
        %vm1777 = vmor %vm1105, %vm1153
        %vm1778 = vmor %vm1106, %vm1154
        %vm1779 = vmor %vm1107, %vm1155
        %vm1780 = vmor %vm1108, %vm1156
        %vm1781 = vmor %vm1109, %vm1157
        %vm1782 = vmor %vm1110, %vm1158
        %vm1783 = vmor %vm1111, %vm1159
        %vm1784 = vmor %vm1112, %vm1160
        %vm1785 = vmor %vm1113, %vm1161
        %vm1786 = vmor %vm1114, %vm1162
        %vm1787 = vmor %vm1115, %vm1163
        %vm1788 = vmor %vm1116, %vm1164
        %vm1789 = vmor %vm1117, %vm1165
        %vm1790 = vmor %vm1118, %vm1166
        %vm1791 = vmor %vm1119, %vm1167
        %vm1792 = vmor %vm1120, %vm1168
        %vm1793 = vmor %vm1121, %vm1169
        %vm1794 = vmor %vm1122, %vm1170
        %vm1795 = vmor %vm1123, %vm1171
        %vm1796 = vmor %vm1124, %vm1172
        %vm1797 = vmor %vm1221, %vm1269
        %vm1798 = vmor %vm1222, %vm1270
        %vm1799 = vmor %vm1223, %vm1271
        %vm1800 = vmor %vm1224, %vm1272
        %vm1801 = vmor %vm1225, %vm1273
        %vm1802 = vmor %vm1226, %vm1274
        %vm1803 = vmor %vm1227, %vm1275
        %vm1804 = vmor %vm1228, %vm1276
        %vm1805 = vmor %vm1229, %vm1277
        %vm1806 = vmor %vm1230, %vm1278
        %vm1807 = vmor %vm1231, %vm1279
        %vm1808 = vmor %vm1232, %vm1280
        %vm1809 = vmor %vm1233, %vm1281
        %vm1810 = vmor %vm1234, %vm1282
        %vm1811 = vmor %vm1235, %vm1283
        %vm1812 = vmor %vm1236, %vm1284
        %vm1813 = vmor %vm1237, %vm1285
        %vm1814 = vmor %vm1238, %vm1286
        %vm1815 = vmor %vm1239, %vm1287
        %vm1816 = vmor %vm1240, %vm1288
        %vm1817 = vmor %vm1241, %vm1289
        %vm1818 = vmor %vm1242, %vm1290
        %vm1819 = vmor %vm1243, %vm1291
        %vm1820 = vmor %vm1244, %vm1292
        %vm1821 = vmor %vm1245, %vm1293
        %vm1822 = vmor %vm1246, %vm1294
        %vm1823 = vmor %vm1247, %vm1295
        %vm1824 = vmor %vm1248, %vm1296
        %vm1825 = vmor %vm1249, %vm1297
        %vm1826 = vmor %vm1250, %vm1298
        %vm1827 = vmor %vm1251, %vm1299
        %vm1828 = vmor %vm1252, %vm1300
        %vm1829 = vmor %vm1253, %vm1301
        %vm1830 = vmor %vm1254, %vm1302
        %vm1831 = vmor %vm1255, %vm1303
        %vm1832 = vmor %vm1256, %vm1304
        %vm1833 = vmor %vm1257, %vm1305
        %vm1834 = vmor %vm1258, %vm1306
        %vm1835 = vmor %vm1259, %vm1307
        %vm1836 = vmor %vm1260, %vm1308
        %vm1837 = vmor %vm1261, %vm1309
        %vm1838 = vmor %vm1262, %vm1310
        %vm1839 = vmor %vm1263, %vm1311
        %vm1840 = vmor %vm1264, %vm1312
        %vm1841 = vmor %vm1265, %vm1313
        %vm1842 = vmor %vm1266, %vm1314
        %vm1843 = vmor %vm1267, %vm1315
        %vm1844 = vmor %vm1268, %vm1316
        %v1845 = vsel %vm1797, %v261, %v837
        %v1846 = vsel %vm1798, %v262, %v838
        %v1847 = vsel %vm1799, %v263, %v839
        %v1848 = vsel %vm1800, %v264, %v840
        %v1849 = vsel %vm1801, %v265, %v841
        %v1850 = vsel %vm1802, %v266, %v842
        %v1851 = vsel %vm1803, %v267, %v843
        %v1852 = vsel %vm1804, %v268, %v844
        %v1853 = vsel %vm1805, %v269, %v845
        %v1854 = vsel %vm1806, %v270, %v846
        %v1855 = vsel %vm1807, %v271, %v847
        %v1856 = vsel %vm1808, %v272, %v848
        %v1857 = vsel %vm1809, %v273, %v849
        %v1858 = vsel %vm1810, %v274, %v850
        %v1859 = vsel %vm1811, %v275, %v851
        %v1860 = vsel %vm1812, %v276, %v852
        %v1861 = vsel %vm1813, %v277, %v853
        %v1862 = vsel %vm1814, %v278, %v854
        %v1863 = vsel %vm1815, %v279, %v855
        %v1864 = vsel %vm1816, %v280, %v856
        %v1865 = vsel %vm1817, %v281, %v857
        %v1866 = vsel %vm1818, %v282, %v858
        %v1867 = vsel %vm1819, %v283, %v859
        %v1868 = vsel %vm1820, %v284, %v860
        %v1869 = vsel %vm1821, %v285, %v861
        %v1870 = vsel %vm1822, %v286, %v862
        %v1871 = vsel %vm1823, %v287, %v863
        %v1872 = vsel %vm1824, %v288, %v864
        %v1873 = vsel %vm1825, %v289, %v865
        %v1874 = vsel %vm1826, %v290, %v866
        %v1875 = vsel %vm1827, %v291, %v867
        %v1876 = vsel %vm1828, %v292, %v868
        %v1877 = vsel %vm1829, %v293, %v869
        %v1878 = vsel %vm1830, %v294, %v870
        %v1879 = vsel %vm1831, %v295, %v871
        %v1880 = vsel %vm1832, %v296, %v872
        %v1881 = vsel %vm1833, %v297, %v873
        %v1882 = vsel %vm1834, %v298, %v874
        %v1883 = vsel %vm1835, %v299, %v875
        %v1884 = vsel %vm1836, %v300, %v876
        %v1885 = vsel %vm1837, %v301, %v877
        %v1886 = vsel %vm1838, %v302, %v878
        %v1887 = vsel %vm1839, %v303, %v879
        %v1888 = vsel %vm1840, %v304, %v880
        %v1889 = vsel %vm1841, %v305, %v881
        %v1890 = vsel %vm1842, %v306, %v882
        %v1891 = vsel %vm1843, %v307, %v883
        %v1892 = vsel %vm1844, %v308, %v884
        %v1893 = vsel %vm1173, %v1029, %v1845
        %v1894 = vsel %vm1174, %v1030, %v1846
        %v1895 = vsel %vm1175, %v1031, %v1847
        %v1896 = vsel %vm1176, %v1032, %v1848
        %v1897 = vsel %vm1177, %v1033, %v1849
        %v1898 = vsel %vm1178, %v1034, %v1850
        %v1899 = vsel %vm1179, %v1035, %v1851
        %v1900 = vsel %vm1180, %v1036, %v1852
        %v1901 = vsel %vm1181, %v1037, %v1853
        %v1902 = vsel %vm1182, %v1038, %v1854
        %v1903 = vsel %vm1183, %v1039, %v1855
        %v1904 = vsel %vm1184, %v1040, %v1856
        %v1905 = vsel %vm1185, %v1041, %v1857
        %v1906 = vsel %vm1186, %v1042, %v1858
        %v1907 = vsel %vm1187, %v1043, %v1859
        %v1908 = vsel %vm1188, %v1044, %v1860
        %v1909 = vsel %vm1189, %v1045, %v1861
        %v1910 = vsel %vm1190, %v1046, %v1862
        %v1911 = vsel %vm1191, %v1047, %v1863
        %v1912 = vsel %vm1192, %v1048, %v1864
        %v1913 = vsel %vm1193, %v1049, %v1865
        %v1914 = vsel %vm1194, %v1050, %v1866
        %v1915 = vsel %vm1195, %v1051, %v1867
        %v1916 = vsel %vm1196, %v1052, %v1868
        %v1917 = vsel %vm1197, %v1053, %v1869
        %v1918 = vsel %vm1198, %v1054, %v1870
        %v1919 = vsel %vm1199, %v1055, %v1871
        %v1920 = vsel %vm1200, %v1056, %v1872
        %v1921 = vsel %vm1201, %v1057, %v1873
        %v1922 = vsel %vm1202, %v1058, %v1874
        %v1923 = vsel %vm1203, %v1059, %v1875
        %v1924 = vsel %vm1204, %v1060, %v1876
        %v1925 = vsel %vm1205, %v1061, %v1877
        %v1926 = vsel %vm1206, %v1062, %v1878
        %v1927 = vsel %vm1207, %v1063, %v1879
        %v1928 = vsel %vm1208, %v1064, %v1880
        %v1929 = vsel %vm1209, %v1065, %v1881
        %v1930 = vsel %vm1210, %v1066, %v1882
        %v1931 = vsel %vm1211, %v1067, %v1883
        %v1932 = vsel %vm1212, %v1068, %v1884
        %v1933 = vsel %vm1213, %v1069, %v1885
        %v1934 = vsel %vm1214, %v1070, %v1886
        %v1935 = vsel %vm1215, %v1071, %v1887
        %v1936 = vsel %vm1216, %v1072, %v1888
        %v1937 = vsel %vm1217, %v1073, %v1889
        %v1938 = vsel %vm1218, %v1074, %v1890
        %v1939 = vsel %vm1219, %v1075, %v1891
        %v1940 = vsel %vm1220, %v1076, %v1892
        %v1941 = vsel %vm1749, %v693, %v1893
        %v1942 = vsel %vm1750, %v694, %v1894
        %v1943 = vsel %vm1751, %v695, %v1895
        %v1944 = vsel %vm1752, %v696, %v1896
        %v1945 = vsel %vm1753, %v697, %v1897
        %v1946 = vsel %vm1754, %v698, %v1898
        %v1947 = vsel %vm1755, %v699, %v1899
        %v1948 = vsel %vm1756, %v700, %v1900
        %v1949 = vsel %vm1757, %v701, %v1901
        %v1950 = vsel %vm1758, %v702, %v1902
        %v1951 = vsel %vm1759, %v703, %v1903
        %v1952 = vsel %vm1760, %v704, %v1904
        %v1953 = vsel %vm1761, %v705, %v1905
        %v1954 = vsel %vm1762, %v706, %v1906
        %v1955 = vsel %vm1763, %v707, %v1907
        %v1956 = vsel %vm1764, %v708, %v1908
        %v1957 = vsel %vm1765, %v709, %v1909
        %v1958 = vsel %vm1766, %v710, %v1910
        %v1959 = vsel %vm1767, %v711, %v1911
        %v1960 = vsel %vm1768, %v712, %v1912
        %v1961 = vsel %vm1769, %v713, %v1913
        %v1962 = vsel %vm1770, %v714, %v1914
        %v1963 = vsel %vm1771, %v715, %v1915
        %v1964 = vsel %vm1772, %v716, %v1916
        %v1965 = vsel %vm1773, %v717, %v1917
        %v1966 = vsel %vm1774, %v718, %v1918
        %v1967 = vsel %vm1775, %v719, %v1919
        %v1968 = vsel %vm1776, %v720, %v1920
        %v1969 = vsel %vm1777, %v721, %v1921
        %v1970 = vsel %vm1778, %v722, %v1922
        %v1971 = vsel %vm1779, %v723, %v1923
        %v1972 = vsel %vm1780, %v724, %v1924
        %v1973 = vsel %vm1781, %v725, %v1925
        %v1974 = vsel %vm1782, %v726, %v1926
        %v1975 = vsel %vm1783, %v727, %v1927
        %v1976 = vsel %vm1784, %v728, %v1928
        %v1977 = vsel %vm1785, %v729, %v1929
        %v1978 = vsel %vm1786, %v730, %v1930
        %v1979 = vsel %vm1787, %v731, %v1931
        %v1980 = vsel %vm1788, %v732, %v1932
        %v1981 = vsel %vm1789, %v733, %v1933
        %v1982 = vsel %vm1790, %v734, %v1934
        %v1983 = vsel %vm1791, %v735, %v1935
        %v1984 = vsel %vm1792, %v736, %v1936
        %v1985 = vsel %vm1793, %v737, %v1937
        %v1986 = vsel %vm1794, %v738, %v1938
        %v1987 = vsel %vm1795, %v739, %v1939
        %v1988 = vsel %vm1796, %v740, %v1940
        %1989 = vst [vmem:[%s160] sm:$0xff] %v1509
        %1990 = vst [vmem:[%s160 + $0x8] sm:$0xff] %v1510
        %1991 = vst [vmem:[%s160 + $0x10] sm:$0xff] %v1511
        %1992 = vst [vmem:[%s160 + $0x18] sm:$0xff] %v1512
        %1993 = vst [vmem:[%s160 + $0x20] sm:$0xff] %v1513
        %1994 = vst [vmem:[%s160 + $0x28] sm:$0xff] %v1514
        %1995 = vst [vmem:[%s160 + $0x30] sm:$0xff] %v1515
        %1996 = vst [vmem:[%s160 + $0x38] sm:$0xff] %v1516
        %1997 = vst [vmem:[%s160 + $0x40] sm:$0xff] %v1517
        %1998 = vst [vmem:[%s160 + $0x48] sm:$0xff] %v1518
        %1999 = vst [vmem:[%s160 + $0x50] sm:$0xff] %v1519
        %2000 = vst [vmem:[%s160 + $0x58] sm:$0xff] %v1520
        %2001 = vst [vmem:[%s160 + $0x60] sm:$0xff] %v1521
        %2002 = vst [vmem:[%s160 + $0x68] sm:$0xff] %v1522
        %2003 = vst [vmem:[%s160 + $0x70] sm:$0xff] %v1523
        %2004 = vst [vmem:[%s160 + $0x78] sm:$0xff] %v1524
        %2005 = vst [vmem:[%s160 + $0x80] sm:$0xff] %v1525
        %2006 = vst [vmem:[%s160 + $0x88] sm:$0xff] %v1526
        %2007 = vst [vmem:[%s160 + $0x90] sm:$0xff] %v1527
        %2008 = vst [vmem:[%s160 + $0x98] sm:$0xff] %v1528
        %2009 = vst [vmem:[%s160 + $0xa0] sm:$0xff] %v1529
        %2010 = vst [vmem:[%s160 + $0xa8] sm:$0xff] %v1530
        %2011 = vst [vmem:[%s160 + $0xb0] sm:$0xff] %v1531
        %2012 = vst [vmem:[%s160 + $0xb8] sm:$0xff] %v1532
        %2013 = vst [vmem:[%s160 + $0xc0] sm:$0xff] %v1533
        %2014 = vst [vmem:[%s160 + $0xc8] sm:$0xff] %v1534
        %2015 = vst [vmem:[%s160 + $0xd0] sm:$0xff] %v1535
        %2016 = vst [vmem:[%s160 + $0xd8] sm:$0xff] %v1536
        %2017 = vst [vmem:[%s160 + $0xe0] sm:$0xff] %v1537
        %2018 = vst [vmem:[%s160 + $0xe8] sm:$0xff] %v1538
        %2019 = vst [vmem:[%s160 + $0xf0] sm:$0xff] %v1539
        %2020 = vst [vmem:[%s160 + $0xf8] sm:$0xff] %v1540
        %2021 = vst [vmem:[%s160 + $0x100] sm:$0xff] %v1541
        %2022 = vst [vmem:[%s160 + $0x108] sm:$0xff] %v1542
        %2023 = vst [vmem:[%s160 + $0x110] sm:$0xff] %v1543
        %2024 = vst [vmem:[%s160 + $0x118] sm:$0xff] %v1544
        %2025 = vst [vmem:[%s160 + $0x120] sm:$0xff] %v1545
        %2026 = vst [vmem:[%s160 + $0x128] sm:$0xff] %v1546
        %2027 = vst [vmem:[%s160 + $0x130] sm:$0xff] %v1547
        %2028 = vst [vmem:[%s160 + $0x138] sm:$0xff] %v1548
        %2029 = vst [vmem:[%s160 + $0x140] sm:$0xff] %v1549
        %2030 = vst [vmem:[%s160 + $0x148] sm:$0xff] %v1550
        %2031 = vst [vmem:[%s160 + $0x150] sm:$0xff] %v1551
        %2032 = vst [vmem:[%s160 + $0x158] sm:$0xff] %v1552
        %2033 = vst [vmem:[%s160 + $0x160] sm:$0xff] %v1553
        %2034 = vst [vmem:[%s160 + $0x168] sm:$0xff] %v1554
        %2035 = vst [vmem:[%s160 + $0x170] sm:$0xff] %v1555
        %2036 = vst [vmem:[%s160 + $0x178] sm:$0xff] %v1556
        %s2037 = scalar_lea.vmem %s160, 384 [#allocation5]
        %2038 = vst [vmem:[%s2037] sm:$0xff] %v1701
        %2039 = vst [vmem:[%s2037 + $0x8] sm:$0xff] %v1702
        %2040 = vst [vmem:[%s2037 + $0x10] sm:$0xff] %v1703
        %2041 = vst [vmem:[%s2037 + $0x18] sm:$0xff] %v1704
        %2042 = vst [vmem:[%s2037 + $0x20] sm:$0xff] %v1705
        %2043 = vst [vmem:[%s2037 + $0x28] sm:$0xff] %v1706
        %2044 = vst [vmem:[%s2037 + $0x30] sm:$0xff] %v1707
        %2045 = vst [vmem:[%s2037 + $0x38] sm:$0xff] %v1708
        %2046 = vst [vmem:[%s2037 + $0x40] sm:$0xff] %v1709
        %2047 = vst [vmem:[%s2037 + $0x48] sm:$0xff] %v1710
        %2048 = vst [vmem:[%s2037 + $0x50] sm:$0xff] %v1711
        %2049 = vst [vmem:[%s2037 + $0x58] sm:$0xff] %v1712
        %2050 = vst [vmem:[%s2037 + $0x60] sm:$0xff] %v1713
        %2051 = vst [vmem:[%s2037 + $0x68] sm:$0xff] %v1714
        %2052 = vst [vmem:[%s2037 + $0x70] sm:$0xff] %v1715
        %2053 = vst [vmem:[%s2037 + $0x78] sm:$0xff] %v1716
        %2054 = vst [vmem:[%s2037 + $0x80] sm:$0xff] %v1717
        %2055 = vst [vmem:[%s2037 + $0x88] sm:$0xff] %v1718
        %2056 = vst [vmem:[%s2037 + $0x90] sm:$0xff] %v1719
        %2057 = vst [vmem:[%s2037 + $0x98] sm:$0xff] %v1720
        %2058 = vst [vmem:[%s2037 + $0xa0] sm:$0xff] %v1721
        %2059 = vst [vmem:[%s2037 + $0xa8] sm:$0xff] %v1722
        %2060 = vst [vmem:[%s2037 + $0xb0] sm:$0xff] %v1723
        %2061 = vst [vmem:[%s2037 + $0xb8] sm:$0xff] %v1724
        %2062 = vst [vmem:[%s2037 + $0xc0] sm:$0xff] %v1725
        %2063 = vst [vmem:[%s2037 + $0xc8] sm:$0xff] %v1726
        %2064 = vst [vmem:[%s2037 + $0xd0] sm:$0xff] %v1727
        %2065 = vst [vmem:[%s2037 + $0xd8] sm:$0xff] %v1728
        %2066 = vst [vmem:[%s2037 + $0xe0] sm:$0xff] %v1729
        %2067 = vst [vmem:[%s2037 + $0xe8] sm:$0xff] %v1730
        %2068 = vst [vmem:[%s2037 + $0xf0] sm:$0xff] %v1731
        %2069 = vst [vmem:[%s2037 + $0xf8] sm:$0xff] %v1732
        %2070 = vst [vmem:[%s2037 + $0x100] sm:$0xff] %v1733
        %2071 = vst [vmem:[%s2037 + $0x108] sm:$0xff] %v1734
        %2072 = vst [vmem:[%s2037 + $0x110] sm:$0xff] %v1735
        %2073 = vst [vmem:[%s2037 + $0x118] sm:$0xff] %v1736
        %2074 = vst [vmem:[%s2037 + $0x120] sm:$0xff] %v1737
        %2075 = vst [vmem:[%s2037 + $0x128] sm:$0xff] %v1738
        %2076 = vst [vmem:[%s2037 + $0x130] sm:$0xff] %v1739
        %2077 = vst [vmem:[%s2037 + $0x138] sm:$0xff] %v1740
        %2078 = vst [vmem:[%s2037 + $0x140] sm:$0xff] %v1741
        %2079 = vst [vmem:[%s2037 + $0x148] sm:$0xff] %v1742
        %2080 = vst [vmem:[%s2037 + $0x150] sm:$0xff] %v1743
        %2081 = vst [vmem:[%s2037 + $0x158] sm:$0xff] %v1744
        %2082 = vst [vmem:[%s2037 + $0x160] sm:$0xff] %v1745
        %2083 = vst [vmem:[%s2037 + $0x168] sm:$0xff] %v1746
        %2084 = vst [vmem:[%s2037 + $0x170] sm:$0xff] %v1747
        %2085 = vst [vmem:[%s2037 + $0x178] sm:$0xff] %v1748
        %s2086 = scalar_lea.vmem %s160, 768 [#allocation5]
        %2087 = vst [vmem:[%s2086] sm:$0xff] %v1941
        %2088 = vst [vmem:[%s2086 + $0x8] sm:$0xff] %v1942
        %2089 = vst [vmem:[%s2086 + $0x10] sm:$0xff] %v1943
        %2090 = vst [vmem:[%s2086 + $0x18] sm:$0xff] %v1944
        %2091 = vst [vmem:[%s2086 + $0x20] sm:$0xff] %v1945
        %2092 = vst [vmem:[%s2086 + $0x28] sm:$0xff] %v1946
        %2093 = vst [vmem:[%s2086 + $0x30] sm:$0xff] %v1947
        %2094 = vst [vmem:[%s2086 + $0x38] sm:$0xff] %v1948
        %2095 = vst [vmem:[%s2086 + $0x40] sm:$0xff] %v1949
        %2096 = vst [vmem:[%s2086 + $0x48] sm:$0xff] %v1950
        %2097 = vst [vmem:[%s2086 + $0x50] sm:$0xff] %v1951
        %2098 = vst [vmem:[%s2086 + $0x58] sm:$0xff] %v1952
        %2099 = vst [vmem:[%s2086 + $0x60] sm:$0xff] %v1953
        %2100 = vst [vmem:[%s2086 + $0x68] sm:$0xff] %v1954
        %2101 = vst [vmem:[%s2086 + $0x70] sm:$0xff] %v1955
        %2102 = vst [vmem:[%s2086 + $0x78] sm:$0xff] %v1956
        %2103 = vst [vmem:[%s2086 + $0x80] sm:$0xff] %v1957
        %2104 = vst [vmem:[%s2086 + $0x88] sm:$0xff] %v1958
        %2105 = vst [vmem:[%s2086 + $0x90] sm:$0xff] %v1959
        %2106 = vst [vmem:[%s2086 + $0x98] sm:$0xff] %v1960
        %2107 = vst [vmem:[%s2086 + $0xa0] sm:$0xff] %v1961
        %2108 = vst [vmem:[%s2086 + $0xa8] sm:$0xff] %v1962
        %2109 = vst [vmem:[%s2086 + $0xb0] sm:$0xff] %v1963
        %2110 = vst [vmem:[%s2086 + $0xb8] sm:$0xff] %v1964
        %2111 = vst [vmem:[%s2086 + $0xc0] sm:$0xff] %v1965
        %2112 = vst [vmem:[%s2086 + $0xc8] sm:$0xff] %v1966
        %2113 = vst [vmem:[%s2086 + $0xd0] sm:$0xff] %v1967
        %2114 = vst [vmem:[%s2086 + $0xd8] sm:$0xff] %v1968
        %2115 = vst [vmem:[%s2086 + $0xe0] sm:$0xff] %v1969
        %2116 = vst [vmem:[%s2086 + $0xe8] sm:$0xff] %v1970
        %2117 = vst [vmem:[%s2086 + $0xf0] sm:$0xff] %v1971
        %2118 = vst [vmem:[%s2086 + $0xf8] sm:$0xff] %v1972
        %2119 = vst [vmem:[%s2086 + $0x100] sm:$0xff] %v1973
        %2120 = vst [vmem:[%s2086 + $0x108] sm:$0xff] %v1974
        %2121 = vst [vmem:[%s2086 + $0x110] sm:$0xff] %v1975
        %2122 = vst [vmem:[%s2086 + $0x118] sm:$0xff] %v1976
        %2123 = vst [vmem:[%s2086 + $0x120] sm:$0xff] %v1977
        %2124 = vst [vmem:[%s2086 + $0x128] sm:$0xff] %v1978
        %2125 = vst [vmem:[%s2086 + $0x130] sm:$0xff] %v1979
        %2126 = vst [vmem:[%s2086 + $0x138] sm:$0xff] %v1980
        %2127 = vst [vmem:[%s2086 + $0x140] sm:$0xff] %v1981
        %2128 = vst [vmem:[%s2086 + $0x148] sm:$0xff] %v1982
        %2129 = vst [vmem:[%s2086 + $0x150] sm:$0xff] %v1983
        %2130 = vst [vmem:[%s2086 + $0x158] sm:$0xff] %v1984
        %2131 = vst [vmem:[%s2086 + $0x160] sm:$0xff] %v1985
        %2132 = vst [vmem:[%s2086 + $0x168] sm:$0xff] %v1986
        %2133 = vst [vmem:[%s2086 + $0x170] sm:$0xff] %v1987
        %2134 = vst [vmem:[%s2086 + $0x178] sm:$0xff] %v1988
        %s2135 = sand.u32 %s52, 1
        %s2136 = scalar_lea.sflag [#allocation4], %s2135
        %s2137 = sand.u32 %s52, 1
        %s2138 = smul.addr %s2137, 1152
        %s2139 = scalar_lea.vmem [#allocation5], %s2138
        // Predicated region
        $region29: #{tpu_custom_call.1} parent=23 // pred_check
          %p2140 = pneg %p62
        $region30: #{tpu_custom_call.1} parent=23 // pred_check_branch
          %2142 = sbr.rel (%p2140) target = $region32
        $region31: #{tpu_custom_call.1} parent=23 // pred_region
          #allocation9 [shape = 'u32[6]{0}', space=smem, size = 0x18, scoped, tag = 'DMA stride descriptor']
          %s2143 = smul.u32 12, %s18
          %s2145 = ssub.s32 18432, 18432
          %2146 = vsyncadd %s2136, %s2145
          %s2147 = smul.addr %s2143, 4
          %s2148 = smul.addr %s2147, 128
          %s2149 = scalar_lea.hbm %s1, %s2148
          %s2151 = sshll.u32 1, 14
          %s2152 = sxor.u32 4294967295, %s2151
          %s2155 = sshll.u32 7, 18
          %s2156 = sxor.u32 4294967295, %s2155
          %s2157 = sand.u32 0, %s2156
          %s2159 = sor.u32 %s2157, 0
          %s2161 = sshll.u32 3, 24
          %s2162 = sxor.u32 4294967295, %s2161
          %s2163 = sand.u32 %s2159, %s2162
          %s2165 = sor.u32 %s2163, 0
          %s2166 = sshll.u32 %s2139, 4
          %s2167 = int_to_ptr.vmem [resolvable:$true] %s2166
          %2173 = sst [smem:[#allocation9]] 6144
          %s2174 = scalar_lea.smem [#allocation9], 1
          %2175 = sst [smem:[%s2174]] 24576
          %s2176 = scalar_lea.smem [#allocation9], 2
          %2177 = sst [smem:[%s2176]] 12
          %s2178 = scalar_lea.smem [#allocation9], 3
          %2179 = sst [smem:[%s2178]] 512
          %s2180 = scalar_lea.smem [#allocation9], 4
          %2181 = sst [smem:[%s2180]] 512
          %s2182 = scalar_lea.smem [#allocation9], 5
          %2183 = sst [smem:[%s2182]] 32
          %2185 = dma.general %s2167, 18432, %s2149, %s2136, [#allocation8], [#allocation9], %s2165, 0
        $region32: #{tpu_custom_call.1} parent=23 // pred_fallthru
          _
      $region24: #{tpu_custom_call.1} parent=5 // pred_fallthru
        _
      %p2186 = scmp.le.s32.totalorder 2, %s13
      // Predicated region
      $region33: #{tpu_custom_call.1} parent=5 // pred_check
        %p2187 = pneg %p2186
      $region34: #{tpu_custom_call.1} parent=5 // pred_check_branch
        %2189 = sbr.rel (%p2187) target = $region36
      $region35: #{tpu_custom_call.1} parent=5 // pred_region
        %s2190 = ssub.s32 %s13, 2
        // Predicated region
        $region37: #{tpu_custom_call.1} parent=35 // pred_check
          %p2191 = pneg %p68
        $region38: #{tpu_custom_call.1} parent=35 // pred_check_branch
          %2193 = sbr.rel (%p2191) target = $region40
        $region39: #{tpu_custom_call.1} parent=35 // pred_region
          %s2194 = sand.u32 %s53, 1
          %s2195 = scalar_lea.sflag [#allocation4], %s2194
          %s2196 = sand.u32 %s53, 1
          %s2197 = smul.addr %s2196, 1152
          %s2198 = scalar_lea.vmem [#allocation5], %s2197
          %2199 = dma.done %s2195, 18432
        $region40: #{tpu_custom_call.1} parent=35 // pred_fallthru
          _
      $region36: #{tpu_custom_call.1} parent=5 // pred_fallthru
        _
    $region6: #{tpu_custom_call.1} parent=1 // loop_footer
      %s17 = sadd.s32 1, %s13
    $region7: #{tpu_custom_call.1} parent=1 // loop_footer_branch
      %12 = sbr.rel target = $region3
    $region8: #{tpu_custom_call.1} parent=1 // loop_exit
      _
    %2200 = vsyncpa [#allocation3], 1
    %s2201 = scalar_lea.sflag [#allocation3], 1
    %2202 = vsyncpa %s2201, 1
    %2203 = vsyncpa [#allocation4], 1
    %s2204 = scalar_lea.sflag [#allocation4], 1
    %2205 = vsyncpa %s2204, 1

</llo_original>
